<compile_context>
chip_gen: v7x
topology: tpu7x:2x2x1
jax: 0.10.0
libtpu: 0.0.40
codegen_flags: <defaults>
</compile_context>

<pallas_src>
import jax
import jax.numpy as jnp
from jax.experimental import pallas as pl
from jax.experimental.pallas import tpu as pltpu

# Logical sizes (PyTorch module) and lane-aligned padded sizes.
IN_F, H1, H2, OUT = 28 * 28, 500, 200, 10
H1_P, H2_P, OUT_P = 512, 256, 128   # hidden/out feature dims padded to 128-multiples

NEG_INF = -1e30  # finite "minus infinity" for masking padded logit lanes


def mlp_kernel(x_ref, w1_ref, b1_ref, w2_ref, b2_ref, w3_ref, b3_ref, o_ref):
    # x arrives as f32 (TM, 784); cast to bf16 only at the MXU boundary.
    x = x_ref[...].astype(jnp.bfloat16)

    # ---- Layer 1: Linear + ReLU (bf16 MXU matmul, f32 accumulate/elementwise)
    h1 = jnp.dot(x, w1_ref[...], preferred_element_type=jnp.float32)
    h1 = jnp.maximum(h1 + b1_ref[...], 0.0)

    # ---- Layer 2: Linear + ReLU
    h2 = jnp.dot(h1.astype(jnp.bfloat16), w2_ref[...],
                 preferred_element_type=jnp.float32)
    h2 = jnp.maximum(h2 + b2_ref[...], 0.0)

    # ---- Layer 3: Linear
    logits = jnp.dot(h2.astype(jnp.bfloat16), w3_ref[...],
                     preferred_element_type=jnp.float32)
    logits = logits + b3_ref[...]

    # Mask the padded class lanes (10..127) so they do not affect the softmax.
    lane = jax.lax.broadcasted_iota(jnp.int32, logits.shape, dimension=1)
    logits = jnp.where(lane < OUT, logits, NEG_INF)

    # ---- LogSoftmax over dim=1 (stable, f32; exp -> EUP, reductions -> XLU)
    m = jnp.max(logits, axis=1, keepdims=True)
    shifted = logits - m
    lse = jnp.log(jnp.sum(jnp.exp(shifted), axis=1, keepdims=True))
    o_ref[...] = (shifted - lse).astype(o_ref.dtype)


def _round_up(n, m):
    return ((n + m - 1) // m) * m


def _pad_to(a, shape):
    return jnp.pad(a, [(0, s - d) for d, s in zip(a.shape, shape)])


def prepare_params(params):
    """One-time parameter prep: pad output feature dims to 128-multiples and
    cast matmul operands to bf16 (biases stay f32).  Call once, reuse across
    forward calls -- the forward itself does no parameter padding/casting."""
    w1, b1, w2, b2, w3, b3 = params
    w1p = _pad_to(w1, (IN_F, H1_P)).astype(jnp.bfloat16)   # K stays 784 (full dim)
    w2p = _pad_to(w2, (H1_P, H2_P)).astype(jnp.bfloat16)
    w3p = _pad_to(w3, (H2_P, OUT_P)).astype(jnp.bfloat16)
    b1p = _pad_to(b1, (1, H1_P)).astype(jnp.float32)
    b2p = _pad_to(b2, (1, H2_P)).astype(jnp.float32)
    b3p = _pad_to(b3, (1, OUT_P)).astype(jnp.float32)
    return (w1p, b1p, w2p, b2p, w3p, b3p)


def mlp_forward(x, padded_params, *, tm=1024, out_dtype=jnp.float32):
    """x: (B, 28, 28) or (B, 1, 28, 28) float32 -> (B, 10) log-probabilities.

    padded_params: output of prepare_params().
    tm: batch tile.  Step overhead (~0.35 us) dominates at small tiles, so use
        ~1024-2048 on v6e, ~512-1024 on v5e (MXU width is irrelevant -- any
        8-multiple feeds it); on v7x pick tm so that B/tm >= 2 grid steps so
        both TensorCores get work under dimension_semantics=("parallel",).
    out_dtype: jnp.float32 (default) or jnp.bfloat16 to halve output traffic.
    """
    B = x.shape[0]
    x_flat = x.reshape(B, -1)  # (B, 784), same as torch .view(len(x), -1)
    assert x_flat.shape[1] == IN_F
    w1p, b1p, w2p, b2p, w3p, b3p = padded_params

    # Batch tile: 8-aligned, never larger than needed for a single tile.
    TM = min(tm, _round_up(B, 8))
    grid = (pl.cdiv(B, TM),)

    # Grid-invariant weights/biases: VMEM-resident, single-buffered.
    def wspec(shape):
        return pl.BlockSpec(shape, lambda i: (0, 0), pipeline_mode=pl.Buffered(1))

    # VMEM budget: resident weights + double-buffered x/out tiles + intermediates.
    weight_bytes = sum(int(a.size) * a.dtype.itemsize
                       for a in (w1p, b1p, w2p, b2p, w3p, b3p))
    per_row_bytes = (2 * IN_F * 4            # x tile, double-buffered f32
                     + 2 * OUT_P * 4         # out tile, double-buffered (f32 worst case)
                     + (H1_P + H2_P + OUT_P) * 8)  # f32 + bf16 intermediates (headroom)
    vmem_bytes = weight_bytes + TM * per_row_bytes + (8 << 20)
    vmem_bytes = max(16 << 20, min(vmem_bytes, 64 << 20))  # 64 MiB = v7x physical cap

    cost = pl.CostEstimate(
        flops=2 * B * (IN_F * H1 + H1 * H2 + H2 * OUT),
        transcendentals=B * (OUT_P + 1),
        bytes_accessed=int(B * IN_F * 4 + weight_bytes
                           + B * OUT_P * jnp.dtype(out_dtype).itemsize),
    )

    out = pl.pallas_call(
        mlp_kernel,
        out_shape=jax.ShapeDtypeStruct((B, OUT_P), out_dtype),
        grid=grid,
        in_specs=[
            # x tile: f32, last dim 784 == full array dim (satisfies (8,128) rule).
            pl.BlockSpec((TM, IN_F), lambda i: (i, 0)),
            wspec((IN_F, H1_P)), wspec((1, H1_P)),
            wspec((H1_P, H2_P)), wspec((1, H2_P)),
            wspec((H2_P, OUT_P)), wspec((1, OUT_P)),
        ],
        out_specs=pl.BlockSpec((TM, OUT_P), lambda i: (i, 0)),
        compiler_params=pltpu.CompilerParams(
            dimension_semantics=("parallel",),   # megacore sharding on v7x
            vmem_limit_bytes=int(vmem_bytes),
        ),
        cost_estimate=cost,
    )(x_flat, w1p, b1p, w2p, b2p, w3p, b3p)

    # Drop padded class lanes -> (B, 10).
    # TODO(synk): fuse the downstream consumer (NLL / argmax) to avoid this
    # (B, 128) -> (B, 10) slice pass entirely.
    return out[:, :OUT]


def init_params(key):
    """Deterministic init matching torch.nn.Linear default
    (U[-1/sqrt(fan_in), 1/sqrt(fan_in)]).  Weights stored (in, out); biases (1, out)."""
    dims = [(IN_F, H1), (H1, H2), (H2, OUT)]
    params = []
    for fan_in, fan_out in dims:
        key, kw, kb = jax.random.split(key, 3)
        bound = 1.0 / jnp.sqrt(float(fan_in))
        w = jax.random.uniform(kw, (fan_in, fan_out), jnp.float32, -bound, bound)
        b = jax.random.uniform(kb, (1, fan_out), jnp.float32, -bound, bound)
        params += [w, b]
    return tuple(params)


if __name__ == "__main__":
    key = jax.random.PRNGKey(0)
    key, kx = jax.random.split(key)

    B = 8
    x = jax.random.normal(kx, (B, 28, 28), jnp.float32)  # small "MNIST-like" batch
    params = init_params(key)
    padded_params = prepare_params(params)               # one-time parameter prep

    out = mlp_forward(x, padded_params)
    out = jax.block_until_ready(out)

    # Pure-JAX f32 reference of the same forward pass (PyTorch semantics).
    w1, b1, w2, b2, w3, b3 = params
    xf = x.reshape(B, -1)
    h1 = jnp.maximum(xf @ w1 + b1, 0.0)
    h2 = jnp.maximum(h1 @ w2 + b2, 0.0)
    logits = h2 @ w3 + b3
    ref = jax.nn.log_softmax(logits, axis=1)

    assert out.shape == (B, 10)
    # bf16 MXU operands (f32 accumulation) => bf16-level tolerance is expected.
    assert jnp.allclose(out, ref, atol=2e-2, rtol=2e-2), float(
        jnp.max(jnp.abs(out - ref)))

    print("KERNEL_OK")
</pallas_src>

<mosaic_0001>
module attributes {stable_mosaic.version = 11 : i64} {
  func.func @mlp_kernel(%arg0: i32, %arg1: memref<8x784xf32, #tpu.memory_space<vmem>>, %arg2: memref<784x512xbf16, #tpu.memory_space<vmem>>, %arg3: memref<1x512xf32, #tpu.memory_space<vmem>>, %arg4: memref<512x256xbf16, #tpu.memory_space<vmem>>, %arg5: memref<1x256xf32, #tpu.memory_space<vmem>>, %arg6: memref<256x128xbf16, #tpu.memory_space<vmem>>, %arg7: memref<1x128xf32, #tpu.memory_space<vmem>>, %arg8: memref<8x128xf32, #tpu.memory_space<vmem>>) attributes {dimension_semantics = [#tpu.dimension_semantics<parallel>], iteration_bounds = array<i64: 1>, scalar_prefetch = 0 : i64, scratch_operands = 0 : i64, tpu.core_type = #tpu.core_type<tc>, window_params = [{transform_indices = @transform_0, window_bounds = array<i64: 8, 784>}, {pipeline_mode = #tpu.pipeline_mode<synchronous>, transform_indices = @transform_1, window_bounds = array<i64: 784, 512>}, {pipeline_mode = #tpu.pipeline_mode<synchronous>, transform_indices = @transform_2, window_bounds = array<i64: 1, 512>}, {pipeline_mode = #tpu.pipeline_mode<synchronous>, transform_indices = @transform_3, window_bounds = array<i64: 512, 256>}, {pipeline_mode = #tpu.pipeline_mode<synchronous>, transform_indices = @transform_4, window_bounds = array<i64: 1, 256>}, {pipeline_mode = #tpu.pipeline_mode<synchronous>, transform_indices = @transform_5, window_bounds = array<i64: 256, 128>}, {pipeline_mode = #tpu.pipeline_mode<synchronous>, transform_indices = @transform_6, window_bounds = array<i64: 1, 128>}, {transform_indices = @transform_7, window_bounds = array<i64: 8, 128>}]} {
    %c0 = arith.constant 0 : index
    %c0_0 = arith.constant 0 : index
    %0 = vector.load %arg1[%c0, %c0_0] : memref<8x784xf32, #tpu.memory_space<vmem>>, vector<8x784xf32>
    %1 = arith.truncf %0 : vector<8x784xf32> to vector<8x784xbf16>
    %c0_1 = arith.constant 0 : index
    %c0_2 = arith.constant 0 : index
    %2 = vector.load %arg2[%c0_1, %c0_2] : memref<784x512xbf16, #tpu.memory_space<vmem>>, vector<784x512xbf16>
    %cst = arith.constant dense<0.000000e+00> : vector<8x512xf32>
    %3 = tpu.matmul %1, %2, %cst {dimension_numbers = #tpu.dot_dimension_numbers<[1], [0], [0], [1], [0, 0, 1, 1], [], []>} : vector<8x784xbf16>, vector<784x512xbf16>, vector<8x512xf32> -> vector<8x512xf32>
    %c0_3 = arith.constant 0 : index
    %c0_4 = arith.constant 0 : index
    %4 = vector.load %arg3[%c0_3, %c0_4] : memref<1x512xf32, #tpu.memory_space<vmem>>, vector<1x512xf32>
    %5 = vector.broadcast %4 : vector<1x512xf32> to vector<8x512xf32>
    %6 = arith.addf %3, %5 : vector<8x512xf32>
    %cst_5 = arith.constant 0.000000e+00 : f32
    %7 = vector.broadcast %cst_5 : f32 to vector<8x512xf32>
    %8 = arith.maximumf %6, %7 : vector<8x512xf32>
    %9 = arith.truncf %8 : vector<8x512xf32> to vector<8x512xbf16>
    %c0_6 = arith.constant 0 : index
    %c0_7 = arith.constant 0 : index
    %10 = vector.load %arg4[%c0_6, %c0_7] : memref<512x256xbf16, #tpu.memory_space<vmem>>, vector<512x256xbf16>
    %cst_8 = arith.constant dense<0.000000e+00> : vector<8x256xf32>
    %11 = tpu.matmul %9, %10, %cst_8 {dimension_numbers = #tpu.dot_dimension_numbers<[1], [0], [0], [1], [0, 0, 1, 1], [], []>} : vector<8x512xbf16>, vector<512x256xbf16>, vector<8x256xf32> -> vector<8x256xf32>
    %c0_9 = arith.constant 0 : index
    %c0_10 = arith.constant 0 : index
    %12 = vector.load %arg5[%c0_9, %c0_10] : memref<1x256xf32, #tpu.memory_space<vmem>>, vector<1x256xf32>
    %13 = vector.broadcast %12 : vector<1x256xf32> to vector<8x256xf32>
    %14 = arith.addf %11, %13 : vector<8x256xf32>
    %cst_11 = arith.constant 0.000000e+00 : f32
    %15 = vector.broadcast %cst_11 : f32 to vector<8x256xf32>
    %16 = arith.maximumf %14, %15 : vector<8x256xf32>
    %17 = arith.truncf %16 : vector<8x256xf32> to vector<8x256xbf16>
    %c0_12 = arith.constant 0 : index
    %c0_13 = arith.constant 0 : index
    %18 = vector.load %arg6[%c0_12, %c0_13] : memref<256x128xbf16, #tpu.memory_space<vmem>>, vector<256x128xbf16>
    %cst_14 = arith.constant dense<0.000000e+00> : vector<8x128xf32>
    %19 = tpu.matmul %17, %18, %cst_14 {dimension_numbers = #tpu.dot_dimension_numbers<[1], [0], [0], [1], [0, 0, 1, 1], [], []>} : vector<8x256xbf16>, vector<256x128xbf16>, vector<8x128xf32> -> vector<8x128xf32>
    %c0_15 = arith.constant 0 : index
    %c0_16 = arith.constant 0 : index
    %20 = vector.load %arg7[%c0_15, %c0_16] : memref<1x128xf32, #tpu.memory_space<vmem>>, vector<1x128xf32>
    %21 = vector.broadcast %20 : vector<1x128xf32> to vector<8x128xf32>
    %22 = arith.addf %19, %21 : vector<8x128xf32>
    %23 = tpu.iota {dimensions = array<i32: 1>} : vector<8x128xi32>
    %c10_i32 = arith.constant 10 : i32
    %24 = vector.broadcast %c10_i32 : i32 to vector<8x128xi32>
    %25 = arith.cmpi slt, %23, %24 : vector<8x128xi32>
    %cst_17 = arith.constant -1.000000e+30 : f32
    %26 = vector.broadcast %cst_17 : f32 to vector<8x128xf32>
    %27 = arith.select %25, %22, %26 : vector<8x128xi1>, vector<8x128xf32>
    %cst_18 = arith.constant dense<0xFF800000> : vector<8xf32>
    %28 = vector.multi_reduction <maximumf>, %27, %cst_18 [1] : vector<8x128xf32> to vector<8xf32>
    %29 = vector.shape_cast %28 : vector<8xf32> to vector<8x1xf32>
    %30 = vector.broadcast %29 : vector<8x1xf32> to vector<8x128xf32>
    %31 = arith.subf %27, %30 : vector<8x128xf32>
    %32 = math.exp %31 : vector<8x128xf32>
    %cst_19 = arith.constant dense<0.000000e+00> : vector<8xf32>
    %33 = vector.multi_reduction <add>, %32, %cst_19 [1] : vector<8x128xf32> to vector<8xf32>
    %34 = vector.shape_cast %33 : vector<8xf32> to vector<8x1xf32>
    %35 = math.log %34 : vector<8x1xf32>
    %36 = vector.broadcast %35 : vector<8x1xf32> to vector<8x128xf32>
    %37 = arith.subf %31, %36 : vector<8x128xf32>
    %c0_20 = arith.constant 0 : index
    %c0_21 = arith.constant 0 : index
    %38 = vector.load %arg8[%c0_20, %c0_21] : memref<8x128xf32, #tpu.memory_space<vmem>>, vector<8x128xf32>
    tpu.vector_store %arg8[%c0_20, %c0_21], %37 {strides = array<i32>} : memref<8x128xf32, #tpu.memory_space<vmem>>, vector<8x128xf32>,
    return
  }
  func.func @transform_0(%arg0: i32) -> (i32, i32) {
    %c0_i32 = arith.constant 0 : i32
    %c0_i32_0 = arith.constant 0 : i32
    return %arg0, %c0_i32 : i32, i32
  }
  func.func @transform_1(%arg0: i32) -> (i32, i32) {
    %c0_i32 = arith.constant 0 : i32
    %c0_i32_0 = arith.constant 0 : i32
    %c0_i32_1 = arith.constant 0 : i32
    return %c0_i32, %c0_i32_0 : i32, i32
  }
  func.func @transform_2(%arg0: i32) -> (i32, i32) {
    %c0_i32 = arith.constant 0 : i32
    %c0_i32_0 = arith.constant 0 : i32
    %c0_i32_1 = arith.constant 0 : i32
    return %c0_i32, %c0_i32_0 : i32, i32
  }
  func.func @transform_3(%arg0: i32) -> (i32, i32) {
    %c0_i32 = arith.constant 0 : i32
    %c0_i32_0 = arith.constant 0 : i32
    %c0_i32_1 = arith.constant 0 : i32
    return %c0_i32, %c0_i32_0 : i32, i32
  }
  func.func @transform_4(%arg0: i32) -> (i32, i32) {
    %c0_i32 = arith.constant 0 : i32
    %c0_i32_0 = arith.constant 0 : i32
    %c0_i32_1 = arith.constant 0 : i32
    return %c0_i32, %c0_i32_0 : i32, i32
  }
  func.func @transform_5(%arg0: i32) -> (i32, i32) {
    %c0_i32 = arith.constant 0 : i32
    %c0_i32_0 = arith.constant 0 : i32
    %c0_i32_1 = arith.constant 0 : i32
    return %c0_i32, %c0_i32_0 : i32, i32
  }
  func.func @transform_6(%arg0: i32) -> (i32, i32) {
    %c0_i32 = arith.constant 0 : i32
    %c0_i32_0 = arith.constant 0 : i32
    %c0_i32_1 = arith.constant 0 : i32
    return %c0_i32, %c0_i32_0 : i32, i32
  }
  func.func @transform_7(%arg0: i32) -> (i32, i32) {
    %c0_i32 = arith.constant 0 : i32
    %c0_i32_0 = arith.constant 0 : i32
    return %arg0, %c0_i32 : i32, i32
  }
}

</mosaic_0001>

<llo_original>
// kernel: tpu_custom_call.1
$region0: #{tpu_custom_call.1}
  #allocation0 [shape = 'u32[]', space=smem, size = 0x4, offset = 0x4, fixed_abs, tag = 'smem constant byte address 0x4 - core index']
  #allocation1 [shape = 'u32[144,128]{1,0:T(1,128)}', space=vmem, size = 0x12000, scoped, tag = 'internal scratch']
  %s0 = inlined_call_operand.hbm [shape: f32[8,784], index: 0, kind: input, shape index: {}]
  %s1 = inlined_call_operand.hbm [shape: bf16[784,512], index: 1, kind: input, shape index: {}]
  %s2 = inlined_call_operand.vmem [shape: f32[1,512], index: 2, kind: input, shape index: {}]
  %s3 = inlined_call_operand.hbm [shape: bf16[512,256], index: 3, kind: input, shape index: {}]
  %s4 = inlined_call_operand.vmem [shape: f32[1,256], index: 4, kind: input, shape index: {}]
  %s5 = inlined_call_operand.hbm [shape: bf16[256,128], index: 5, kind: input, shape index: {}]
  %s6 = inlined_call_operand.vmem [shape: f32[1,128], index: 6, kind: input, shape index: {}]
  %s7 = inlined_call_operand.hbm [shape: f32[8,128], index: 7, kind: output, shape index: {}]
  %s8 = sld [smem:[#allocation0]]
  $region54: #{tpu_custom_call.1} parent=0
    _
  %s10 = ssub.s32 1, %s8
  %s11 = scalar_select 0, %s10, %s8
  $region1: #{tpu_custom_call.1} parent=0
    #allocation2 [shape = 'u8[28672]{0}', space=vmem, size = 0x7000, scoped, tag = 'input window, operand 0, single buffered']
    #allocation3 [shape = 's32[1]{0}', space=sflag, size = 0x4, scoped, tag = 'scoped memory for tpu_custom_call.1']
    #allocation4 [shape = 's32[1]{0}', space=sflag, size = 0x4, scoped, tag = 'scoped memory for tpu_custom_call.1']
    #allocation5 [shape = 'u8[802816]{0}', space=vmem, size = 0xc4000, scoped, tag = 'input window, operand 1, single buffered']
    #allocation6 [shape = 's32[1]{0}', space=sflag, size = 0x4, scoped, tag = 'scoped memory for tpu_custom_call.1']
    #allocation7 [shape = 'u8[262144]{0}', space=vmem, size = 0x40000, scoped, tag = 'input window, operand 3, single buffered']
    #allocation8 [shape = 'u8[65536]{0}', space=vmem, size = 0x10000, scoped, tag = 'input window, operand 5, single buffered']
    #allocation9 [shape = 's32[1]{0}', space=sflag, size = 0x4, scoped, tag = 'scoped memory for tpu_custom_call.1']
    #allocation10 [shape = 'u8[4096]{0}', space=vmem, size = 0x1000, scoped, tag = 'output window, operand 0, single buffered']
    %12 = vsyncpa [#allocation3], 0
    %13 = vsyncpa [#allocation6], 0
    %14 = vsyncpa [#allocation9], 0
    %15 = vsyncpa [#allocation4], 0
    // Predicated region
    $region2: #{tpu_custom_call.1} parent=1 // pred_check
      _
    $region3: #{tpu_custom_call.1} parent=1 // pred_check_branch
      %17 = sbr.rel (0) target = $region5
    $region4: #{tpu_custom_call.1} parent=1 // pred_region
      %s19 = ssub.s32 896, 896
      %20 = vsyncadd [#allocation3], %s19
      %s22 = sshll.u32 [#allocation2], 4
      %s23 = int_to_ptr.vmem [resolvable:$true] %s22
      %25 = dma.hbm_to_vmem [thread:$0]  %s0, 896, %s23, [#allocation3]
    $region5: #{tpu_custom_call.1} parent=1 // pred_fallthru
      _
    // Predicated region
    $region6: #{tpu_custom_call.1} parent=1 // pred_check
      _
    $region7: #{tpu_custom_call.1} parent=1 // pred_check_branch
      %27 = sbr.rel (0) target = $region9
    $region8: #{tpu_custom_call.1} parent=1 // pred_region
      %s29 = ssub.s32 25088, 25088
      %30 = vsyncadd [#allocation6], %s29
      %s31 = sshll.u32 [#allocation5], 4
      %s32 = int_to_ptr.vmem [resolvable:$true] %s31
      %37 = dma.hbm_to_vmem [thread:$0]  %s1, 25088, %s32, [#allocation6], 256, 256, 16
    $region9: #{tpu_custom_call.1} parent=1 // pred_fallthru
      _
    // Predicated region
    $region10: #{tpu_custom_call.1} parent=1 // pred_check
      _
    $region11: #{tpu_custom_call.1} parent=1 // pred_check_branch
      %39 = sbr.rel (0) target = $region13
    $region12: #{tpu_custom_call.1} parent=1 // pred_region
      _
    $region13: #{tpu_custom_call.1} parent=1 // pred_fallthru
      _
    // Predicated region
    $region14: #{tpu_custom_call.1} parent=1 // pred_check
      _
    $region15: #{tpu_custom_call.1} parent=1 // pred_check_branch
      %41 = sbr.rel (0) target = $region17
    $region16: #{tpu_custom_call.1} parent=1 // pred_region
      %s43 = ssub.s32 8192, 8192
      %44 = vsyncadd [#allocation6], %s43
      %s45 = sshll.u32 [#allocation7], 4
      %s46 = int_to_ptr.vmem [resolvable:$true] %s45
      %51 = dma.hbm_to_vmem [thread:$0]  %s3, 8192, %s46, [#allocation6], 128, 128, 8
    $region17: #{tpu_custom_call.1} parent=1 // pred_fallthru
      _
    // Predicated region
    $region18: #{tpu_custom_call.1} parent=1 // pred_check
      _
    $region19: #{tpu_custom_call.1} parent=1 // pred_check_branch
      %53 = sbr.rel (0) target = $region21
    $region20: #{tpu_custom_call.1} parent=1 // pred_region
      _
    $region21: #{tpu_custom_call.1} parent=1 // pred_fallthru
      _
    // Predicated region
    $region22: #{tpu_custom_call.1} parent=1 // pred_check
      _
    $region23: #{tpu_custom_call.1} parent=1 // pred_check_branch
      %55 = sbr.rel (0) target = $region25
    $region24: #{tpu_custom_call.1} parent=1 // pred_region
      %s57 = ssub.s32 2048, 2048
      %58 = vsyncadd [#allocation9], %s57
      %s59 = sshll.u32 [#allocation8], 4
      %s60 = int_to_ptr.vmem [resolvable:$true] %s59
      %65 = dma.hbm_to_vmem [thread:$0]  %s5, 2048, %s60, [#allocation9], 64, 64, 4
    $region25: #{tpu_custom_call.1} parent=1 // pred_fallthru
      _
    // Predicated region
    $region26: #{tpu_custom_call.1} parent=1 // pred_check
      _
    $region27: #{tpu_custom_call.1} parent=1 // pred_check_branch
      %67 = sbr.rel (0) target = $region29
    $region28: #{tpu_custom_call.1} parent=1 // pred_region
      _
    $region29: #{tpu_custom_call.1} parent=1 // pred_fallthru
      _
    // Predicated region
    $region30: #{tpu_custom_call.1} parent=1 // pred_check
      _
    $region31: #{tpu_custom_call.1} parent=1 // pred_check_branch
      %69 = sbr.rel (0) target = $region33
    $region32: #{tpu_custom_call.1} parent=1 // pred_region
      %70 = dma.done [#allocation3], 896
    $region33: #{tpu_custom_call.1} parent=1 // pred_fallthru
      _
    // Predicated region
    $region34: #{tpu_custom_call.1} parent=1 // pred_check
      _
    $region35: #{tpu_custom_call.1} parent=1 // pred_check_branch
      %72 = sbr.rel (0) target = $region37
    $region36: #{tpu_custom_call.1} parent=1 // pred_region
      %73 = dma.done [#allocation6], 25088
    $region37: #{tpu_custom_call.1} parent=1 // pred_fallthru
      _
    // Predicated region
    $region38: #{tpu_custom_call.1} parent=1 // pred_check
      _
    $region39: #{tpu_custom_call.1} parent=1 // pred_check_branch
      %75 = sbr.rel (0) target = $region41
    $region40: #{tpu_custom_call.1} parent=1 // pred_region
      %76 = dma.done [#allocation6], 8192
    $region41: #{tpu_custom_call.1} parent=1 // pred_fallthru
      _
    // Predicated region
    $region42: #{tpu_custom_call.1} parent=1 // pred_check
      _
    $region43: #{tpu_custom_call.1} parent=1 // pred_check_branch
      %78 = sbr.rel (0) target = $region45
    $region44: #{tpu_custom_call.1} parent=1 // pred_region
      %79 = dma.done [#allocation9], 2048
    $region45: #{tpu_custom_call.1} parent=1 // pred_fallthru
      _
    %v81 = vld [vmem:[#allocation2] sm:$0xff]
    %v82 = vld [vmem:[#allocation2 + $0x8] sm:$0xff]
    %v83 = vld [vmem:[#allocation2 + $0x10] sm:$0xff]
    %v84 = vld [vmem:[#allocation2 + $0x18] sm:$0xff]
    %v85 = vld [vmem:[#allocation2 + $0x20] sm:$0xff]
    %v86 = vld [vmem:[#allocation2 + $0x28] sm:$0xff]
    %v87 = vld [vmem:[#allocation2 + $0x30] sm:$0xff]
    %v88 = vpack.c.bf16 %v81, %v81
    %v89 = vpack.c.bf16 %v82, %v82
    %v90 = vpack.c.bf16 %v83, %v83
    %v91 = vpack.c.bf16 %v84, %v84
    %v92 = vpack.c.bf16 %v85, %v85
    %v93 = vpack.c.bf16 %v86, %v86
    %v94 = vpack.c.bf16 %v87, %v87
    %v95 = vld [vmem:[#allocation5] sm:$0xff]
    %v96 = vld [vmem:[#allocation5 + $0x8] sm:$0xff]
    %v97 = vld [vmem:[#allocation5 + $0x10] sm:$0xff]
    %v98 = vld [vmem:[#allocation5 + $0x18] sm:$0xff]
    %v99 = vld [vmem:[#allocation5 + $0x20] sm:$0xff]
    %v100 = vld [vmem:[#allocation5 + $0x28] sm:$0xff]
    %v101 = vld [vmem:[#allocation5 + $0x30] sm:$0xff]
    %v102 = vld [vmem:[#allocation5 + $0x38] sm:$0xff]
    %v103 = vld [vmem:[#allocation5 + $0x40] sm:$0xff]
    %v104 = vld [vmem:[#allocation5 + $0x48] sm:$0xff]
    %v105 = vld [vmem:[#allocation5 + $0x50] sm:$0xff]
    %v106 = vld [vmem:[#allocation5 + $0x58] sm:$0xff]
    %v107 = vld [vmem:[#allocation5 + $0x60] sm:$0xff]
    %v108 = vld [vmem:[#allocation5 + $0x68] sm:$0xff]
    %v109 = vld [vmem:[#allocation5 + $0x70] sm:$0xff]
    %v110 = vld [vmem:[#allocation5 + $0x78] sm:$0xff]
    %v111 = vld [vmem:[#allocation5 + $0x80] sm:$0xff]
    %v112 = vld [vmem:[#allocation5 + $0x88] sm:$0xff]
    %v113 = vld [vmem:[#allocation5 + $0x90] sm:$0xff]
    %v114 = vld [vmem:[#allocation5 + $0x98] sm:$0xff]
    %v115 = vld [vmem:[#allocation5 + $0xa0] sm:$0xff]
    %v116 = vld [vmem:[#allocation5 + $0xa8] sm:$0xff]
    %v117 = vld [vmem:[#allocation5 + $0xb0] sm:$0xff]
    %v118 = vld [vmem:[#allocation5 + $0xb8] sm:$0xff]
    %v119 = vld [vmem:[#allocation5 + $0xc0] sm:$0xff]
    %v120 = vld [vmem:[#allocation5 + $0xc8] sm:$0xff]
    %v121 = vld [vmem:[#allocation5 + $0xd0] sm:$0xff]
    %v122 = vld [vmem:[#allocation5 + $0xd8] sm:$0xff]
    %v123 = vld [vmem:[#allocation5 + $0xe0] sm:$0xff]
    %v124 = vld [vmem:[#allocation5 + $0xe8] sm:$0xff]
    %v125 = vld [vmem:[#allocation5 + $0xf0] sm:$0xff]
    %v126 = vld [vmem:[#allocation5 + $0xf8] sm:$0xff]
    %v127 = vld [vmem:[#allocation5 + $0x100] sm:$0xff]
    %v128 = vld [vmem:[#allocation5 + $0x108] sm:$0xff]
    %v129 = vld [vmem:[#allocation5 + $0x110] sm:$0xff]
    %v130 = vld [vmem:[#allocation5 + $0x118] sm:$0xff]
    %v131 = vld [vmem:[#allocation5 + $0x120] sm:$0xff]
    %v132 = vld [vmem:[#allocation5 + $0x128] sm:$0xff]
    %v133 = vld [vmem:[#allocation5 + $0x130] sm:$0xff]
    %v134 = vld [vmem:[#allocation5 + $0x138] sm:$0xff]
    %v135 = vld [vmem:[#allocation5 + $0x140] sm:$0xff]
    %v136 = vld [vmem:[#allocation5 + $0x148] sm:$0xff]
    %v137 = vld [vmem:[#allocation5 + $0x150] sm:$0xff]
    %v138 = vld [vmem:[#allocation5 + $0x158] sm:$0xff]
    %v139 = vld [vmem:[#allocation5 + $0x160] sm:$0xff]
    %v140 = vld [vmem:[#allocation5 + $0x168] sm:$0xff]
    %v141 = vld [vmem:[#allocation5 + $0x170] sm:$0xff]
    %v142 = vld [vmem:[#allocation5 + $0x178] sm:$0xff]
    %v143 = vld [vmem:[#allocation5 + $0x180] sm:$0xff]
    %v144 = vld [vmem:[#allocation5 + $0x188] sm:$0xff]
    %v145 = vld [vmem:[#allocation5 + $0x190] sm:$0xff]
    %v146 = vld [vmem:[#allocation5 + $0x198] sm:$0xff]
    %v147 = vld [vmem:[#allocation5 + $0x1a0] sm:$0xff]
    %v148 = vld [vmem:[#allocation5 + $0x1a8] sm:$0xff]
    %v149 = vld [vmem:[#allocation5 + $0x1b0] sm:$0xff]
    %v150 = vld [vmem:[#allocation5 + $0x1b8] sm:$0xff]
    %v151 = vld [vmem:[#allocation5 + $0x1c0] sm:$0xff]
    %v152 = vld [vmem:[#allocation5 + $0x1c8] sm:$0xff]
    %v153 = vld [vmem:[#allocation5 + $0x1d0] sm:$0xff]
    %v154 = vld [vmem:[#allocation5 + $0x1d8] sm:$0xff]
    %v155 = vld [vmem:[#allocation5 + $0x1e0] sm:$0xff]
    %v156 = vld [vmem:[#allocation5 + $0x1e8] sm:$0xff]
    %v157 = vld [vmem:[#allocation5 + $0x1f0] sm:$0xff]
    %v158 = vld [vmem:[#allocation5 + $0x1f8] sm:$0xff]
    %v159 = vld [vmem:[#allocation5 + $0x200] sm:$0xff]
    %v160 = vld [vmem:[#allocation5 + $0x208] sm:$0xff]
    %v161 = vld [vmem:[#allocation5 + $0x210] sm:$0xff]
    %v162 = vld [vmem:[#allocation5 + $0x218] sm:$0xff]
    %v163 = vld [vmem:[#allocation5 + $0x220] sm:$0xff]
    %v164 = vld [vmem:[#allocation5 + $0x228] sm:$0xff]
    %v165 = vld [vmem:[#allocation5 + $0x230] sm:$0xff]
    %v166 = vld [vmem:[#allocation5 + $0x238] sm:$0xff]
    %v167 = vld [vmem:[#allocation5 + $0x240] sm:$0xff]
    %v168 = vld [vmem:[#allocation5 + $0x248] sm:$0xff]
    %v169 = vld [vmem:[#allocation5 + $0x250] sm:$0xff]
    %v170 = vld [vmem:[#allocation5 + $0x258] sm:$0xff]
    %v171 = vld [vmem:[#allocation5 + $0x260] sm:$0xff]
    %v172 = vld [vmem:[#allocation5 + $0x268] sm:$0xff]
    %v173 = vld [vmem:[#allocation5 + $0x270] sm:$0xff]
    %v174 = vld [vmem:[#allocation5 + $0x278] sm:$0xff]
    %v175 = vld [vmem:[#allocation5 + $0x280] sm:$0xff]
    %v176 = vld [vmem:[#allocation5 + $0x288] sm:$0xff]
    %v177 = vld [vmem:[#allocation5 + $0x290] sm:$0xff]
    %v178 = vld [vmem:[#allocation5 + $0x298] sm:$0xff]
    %v179 = vld [vmem:[#allocation5 + $0x2a0] sm:$0xff]
    %v180 = vld [vmem:[#allocation5 + $0x2a8] sm:$0xff]
    %v181 = vld [vmem:[#allocation5 + $0x2b0] sm:$0xff]
    %v182 = vld [vmem:[#allocation5 + $0x2b8] sm:$0xff]
    %v183 = vld [vmem:[#allocation5 + $0x2c0] sm:$0xff]
    %v184 = vld [vmem:[#allocation5 + $0x2c8] sm:$0xff]
    %v185 = vld [vmem:[#allocation5 + $0x2d0] sm:$0xff]
    %v186 = vld [vmem:[#allocation5 + $0x2d8] sm:$0xff]
    %v187 = vld [vmem:[#allocation5 + $0x2e0] sm:$0xff]
    %v188 = vld [vmem:[#allocation5 + $0x2e8] sm:$0xff]
    %v189 = vld [vmem:[#allocation5 + $0x2f0] sm:$0xff]
    %v190 = vld [vmem:[#allocation5 + $0x2f8] sm:$0xff]
    %v191 = vld [vmem:[#allocation5 + $0x300] sm:$0xff]
    %v192 = vld [vmem:[#allocation5 + $0x308] sm:$0xff]
    %v193 = vld [vmem:[#allocation5 + $0x310] sm:$0xff]
    %v194 = vld [vmem:[#allocation5 + $0x318] sm:$0xff]
    %v195 = vld [vmem:[#allocation5 + $0x320] sm:$0xff]
    %v196 = vld [vmem:[#allocation5 + $0x328] sm:$0xff]
    %v197 = vld [vmem:[#allocation5 + $0x330] sm:$0xff]
    %v198 = vld [vmem:[#allocation5 + $0x338] sm:$0xff]
    %v199 = vld [vmem:[#allocation5 + $0x340] sm:$0xff]
    %v200 = vld [vmem:[#allocation5 + $0x348] sm:$0xff]
    %v201 = vld [vmem:[#allocation5 + $0x350] sm:$0xff]
    %v202 = vld [vmem:[#allocation5 + $0x358] sm:$0xff]
    %v203 = vld [vmem:[#allocation5 + $0x360] sm:$0xff]
    %v204 = vld [vmem:[#allocation5 + $0x368] sm:$0xff]
    %v205 = vld [vmem:[#allocation5 + $0x370] sm:$0xff]
    %v206 = vld [vmem:[#allocation5 + $0x378] sm:$0xff]
    %v207 = vld [vmem:[#allocation5 + $0x380] sm:$0xff]
    %v208 = vld [vmem:[#allocation5 + $0x388] sm:$0xff]
    %v209 = vld [vmem:[#allocation5 + $0x390] sm:$0xff]
    %v210 = vld [vmem:[#allocation5 + $0x398] sm:$0xff]
    %v211 = vld [vmem:[#allocation5 + $0x3a0] sm:$0xff]
    %v212 = vld [vmem:[#allocation5 + $0x3a8] sm:$0xff]
    %v213 = vld [vmem:[#allocation5 + $0x3b0] sm:$0xff]
    %v214 = vld [vmem:[#allocation5 + $0x3b8] sm:$0xff]
    %v215 = vld [vmem:[#allocation5 + $0x3c0] sm:$0xff]
    %v216 = vld [vmem:[#allocation5 + $0x3c8] sm:$0xff]
    %v217 = vld [vmem:[#allocation5 + $0x3d0] sm:$0xff]
    %v218 = vld [vmem:[#allocation5 + $0x3d8] sm:$0xff]
    %v219 = vld [vmem:[#allocation5 + $0x3e0] sm:$0xff]
    %v220 = vld [vmem:[#allocation5 + $0x3e8] sm:$0xff]
    %v221 = vld [vmem:[#allocation5 + $0x3f0] sm:$0xff]
    %v222 = vld [vmem:[#allocation5 + $0x3f8] sm:$0xff]
    %v223 = vld [vmem:[#allocation5 + $0x400] sm:$0xff]
    %v224 = vld [vmem:[#allocation5 + $0x408] sm:$0xff]
    %v225 = vld [vmem:[#allocation5 + $0x410] sm:$0xff]
    %v226 = vld [vmem:[#allocation5 + $0x418] sm:$0xff]
    %v227 = vld [vmem:[#allocation5 + $0x420] sm:$0xff]
    %v228 = vld [vmem:[#allocation5 + $0x428] sm:$0xff]
    %v229 = vld [vmem:[#allocation5 + $0x430] sm:$0xff]
    %v230 = vld [vmem:[#allocation5 + $0x438] sm:$0xff]
    %v231 = vld [vmem:[#allocation5 + $0x440] sm:$0xff]
    %v232 = vld [vmem:[#allocation5 + $0x448] sm:$0xff]
    %v233 = vld [vmem:[#allocation5 + $0x450] sm:$0xff]
    %v234 = vld [vmem:[#allocation5 + $0x458] sm:$0xff]
    %v235 = vld [vmem:[#allocation5 + $0x460] sm:$0xff]
    %v236 = vld [vmem:[#allocation5 + $0x468] sm:$0xff]
    %v237 = vld [vmem:[#allocation5 + $0x470] sm:$0xff]
    %v238 = vld [vmem:[#allocation5 + $0x478] sm:$0xff]
    %v239 = vld [vmem:[#allocation5 + $0x480] sm:$0xff]
    %v240 = vld [vmem:[#allocation5 + $0x488] sm:$0xff]
    %v241 = vld [vmem:[#allocation5 + $0x490] sm:$0xff]
    %v242 = vld [vmem:[#allocation5 + $0x498] sm:$0xff]
    %v243 = vld [vmem:[#allocation5 + $0x4a0] sm:$0xff]
    %v244 = vld [vmem:[#allocation5 + $0x4a8] sm:$0xff]
    %v245 = vld [vmem:[#allocation5 + $0x4b0] sm:$0xff]
    %v246 = vld [vmem:[#allocation5 + $0x4b8] sm:$0xff]
    %v247 = vld [vmem:[#allocation5 + $0x4c0] sm:$0xff]
    %v248 = vld [vmem:[#allocation5 + $0x4c8] sm:$0xff]
    %v249 = vld [vmem:[#allocation5 + $0x4d0] sm:$0xff]
    %v250 = vld [vmem:[#allocation5 + $0x4d8] sm:$0xff]
    %v251 = vld [vmem:[#allocation5 + $0x4e0] sm:$0xff]
    %v252 = vld [vmem:[#allocation5 + $0x4e8] sm:$0xff]
    %v253 = vld [vmem:[#allocation5 + $0x4f0] sm:$0xff]
    %v254 = vld [vmem:[#allocation5 + $0x4f8] sm:$0xff]
    %v255 = vld [vmem:[#allocation5 + $0x500] sm:$0xff]
    %v256 = vld [vmem:[#allocation5 + $0x508] sm:$0xff]
    %v257 = vld [vmem:[#allocation5 + $0x510] sm:$0xff]
    %v258 = vld [vmem:[#allocation5 + $0x518] sm:$0xff]
    %v259 = vld [vmem:[#allocation5 + $0x520] sm:$0xff]
    %v260 = vld [vmem:[#allocation5 + $0x528] sm:$0xff]
    %v261 = vld [vmem:[#allocation5 + $0x530] sm:$0xff]
    %v262 = vld [vmem:[#allocation5 + $0x538] sm:$0xff]
    %v263 = vld [vmem:[#allocation5 + $0x540] sm:$0xff]
    %v264 = vld [vmem:[#allocation5 + $0x548] sm:$0xff]
    %v265 = vld [vmem:[#allocation5 + $0x550] sm:$0xff]
    %v266 = vld [vmem:[#allocation5 + $0x558] sm:$0xff]
    %v267 = vld [vmem:[#allocation5 + $0x560] sm:$0xff]
    %v268 = vld [vmem:[#allocation5 + $0x568] sm:$0xff]
    %v269 = vld [vmem:[#allocation5 + $0x570] sm:$0xff]
    %v270 = vld [vmem:[#allocation5 + $0x578] sm:$0xff]
    %v271 = vld [vmem:[#allocation5 + $0x580] sm:$0xff]
    %v272 = vld [vmem:[#allocation5 + $0x588] sm:$0xff]
    %v273 = vld [vmem:[#allocation5 + $0x590] sm:$0xff]
    %v274 = vld [vmem:[#allocation5 + $0x598] sm:$0xff]
    %v275 = vld [vmem:[#allocation5 + $0x5a0] sm:$0xff]
    %v276 = vld [vmem:[#allocation5 + $0x5a8] sm:$0xff]
    %v277 = vld [vmem:[#allocation5 + $0x5b0] sm:$0xff]
    %v278 = vld [vmem:[#allocation5 + $0x5b8] sm:$0xff]
    %v279 = vld [vmem:[#allocation5 + $0x5c0] sm:$0xff]
    %v280 = vld [vmem:[#allocation5 + $0x5c8] sm:$0xff]
    %v281 = vld [vmem:[#allocation5 + $0x5d0] sm:$0xff]
    %v282 = vld [vmem:[#allocation5 + $0x5d8] sm:$0xff]
    %v283 = vld [vmem:[#allocation5 + $0x5e0] sm:$0xff]
    %v284 = vld [vmem:[#allocation5 + $0x5e8] sm:$0xff]
    %v285 = vld [vmem:[#allocation5 + $0x5f0] sm:$0xff]
    %v286 = vld [vmem:[#allocation5 + $0x5f8] sm:$0xff]
    %v287 = vld [vmem:[#allocation5 + $0x600] sm:$0xff]
    %v288 = vld [vmem:[#allocation5 + $0x608] sm:$0xff]
    %v289 = vld [vmem:[#allocation5 + $0x610] sm:$0xff]
    %v290 = vld [vmem:[#allocation5 + $0x618] sm:$0xff]
    %v291 = vld [vmem:[%s2] sm:$0xf]
    %v293 = vlaneseq
    %v294 = vshrl.u32 %v293, 7
    %v295 = vsub.s32 0, %v294
    %v296 = vrot.slane %v291, %v295
    %v297 = vlaneseq
    %v298 = vshrl.u32 %v297, 7
    %v299 = vsub.s32 1, %v298
    %v300 = vrot.slane %v291, %v299
    %v301 = vlaneseq
    %v302 = vshrl.u32 %v301, 7
    %v303 = vsub.s32 2, %v302
    %v304 = vrot.slane %v291, %v303
    %v305 = vlaneseq
    %v306 = vshrl.u32 %v305, 7
    %v307 = vsub.s32 3, %v306
    %v308 = vrot.slane %v291, %v307
    %v509 = vunpack.c.l.b16 %v95
    %v510 = vunpack.c.h.b16 %v95
    %v511 = vunpack.c.l.b16 %v96
    %v512 = vunpack.c.h.b16 %v96
    %v513 = vunpack.c.l.b16 %v97
    %v514 = vunpack.c.h.b16 %v97
    %v515 = vunpack.c.l.b16 %v98
    %v516 = vunpack.c.h.b16 %v98
    %v517 = vunpack.c.l.b16 %v99
    %v518 = vunpack.c.h.b16 %v99
    %v519 = vunpack.c.l.b16 %v100
    %v520 = vunpack.c.h.b16 %v100
    %v521 = vunpack.c.l.b16 %v101
    %v522 = vunpack.c.h.b16 %v101
    %v523 = vunpack.c.l.b16 %v102
    %v524 = vunpack.c.h.b16 %v102
    %v525 = vunpack.c.l.b16 %v103
    %v526 = vunpack.c.h.b16 %v103
    %v527 = vunpack.c.l.b16 %v104
    %v528 = vunpack.c.h.b16 %v104
    %v529 = vunpack.c.l.b16 %v105
    %v530 = vunpack.c.h.b16 %v105
    %v531 = vunpack.c.l.b16 %v106
    %v532 = vunpack.c.h.b16 %v106
    %v533 = vunpack.c.l.b16 %v107
    %v534 = vunpack.c.h.b16 %v107
    %v535 = vunpack.c.l.b16 %v108
    %v536 = vunpack.c.h.b16 %v108
    %v537 = vunpack.c.l.b16 %v109
    %v538 = vunpack.c.h.b16 %v109
    %v539 = vunpack.c.l.b16 %v110
    %v540 = vunpack.c.h.b16 %v110
    %v541 = vunpack.c.l.b16 %v111
    %v542 = vunpack.c.h.b16 %v111
    %v543 = vunpack.c.l.b16 %v112
    %v544 = vunpack.c.h.b16 %v112
    %v545 = vunpack.c.l.b16 %v113
    %v546 = vunpack.c.h.b16 %v113
    %v547 = vunpack.c.l.b16 %v114
    %v548 = vunpack.c.h.b16 %v114
    %v549 = vunpack.c.l.b16 %v115
    %v550 = vunpack.c.h.b16 %v115
    %v551 = vunpack.c.l.b16 %v116
    %v552 = vunpack.c.h.b16 %v116
    %v553 = vunpack.c.l.b16 %v117
    %v554 = vunpack.c.h.b16 %v117
    %v555 = vunpack.c.l.b16 %v118
    %v556 = vunpack.c.h.b16 %v118
    %v557 = vunpack.c.l.b16 %v119
    %v558 = vunpack.c.h.b16 %v119
    %v559 = vunpack.c.l.b16 %v120
    %v560 = vunpack.c.h.b16 %v120
    %v561 = vunpack.c.l.b16 %v121
    %v562 = vunpack.c.h.b16 %v121
    %v563 = vunpack.c.l.b16 %v122
    %v564 = vunpack.c.h.b16 %v122
    %v565 = vunpack.c.l.b16 %v123
    %v566 = vunpack.c.h.b16 %v123
    %v567 = vunpack.c.l.b16 %v124
    %v568 = vunpack.c.h.b16 %v124
    %v569 = vunpack.c.l.b16 %v125
    %v570 = vunpack.c.h.b16 %v125
    %v571 = vunpack.c.l.b16 %v126
    %v572 = vunpack.c.h.b16 %v126
    %v573 = vunpack.c.l.b16 %v127
    %v574 = vunpack.c.h.b16 %v127
    %v575 = vunpack.c.l.b16 %v128
    %v576 = vunpack.c.h.b16 %v128
    %v577 = vunpack.c.l.b16 %v129
    %v578 = vunpack.c.h.b16 %v129
    %v579 = vunpack.c.l.b16 %v130
    %v580 = vunpack.c.h.b16 %v130
    %v581 = vunpack.c.l.b16 %v131
    %v582 = vunpack.c.h.b16 %v131
    %v583 = vunpack.c.l.b16 %v132
    %v584 = vunpack.c.h.b16 %v132
    %v585 = vunpack.c.l.b16 %v133
    %v586 = vunpack.c.h.b16 %v133
    %v587 = vunpack.c.l.b16 %v134
    %v588 = vunpack.c.h.b16 %v134
    %v589 = vunpack.c.l.b16 %v135
    %v590 = vunpack.c.h.b16 %v135
    %v591 = vunpack.c.l.b16 %v136
    %v592 = vunpack.c.h.b16 %v136
    %v593 = vunpack.c.l.b16 %v137
    %v594 = vunpack.c.h.b16 %v137
    %v595 = vunpack.c.l.b16 %v138
    %v596 = vunpack.c.h.b16 %v138
    %v597 = vunpack.c.l.b16 %v139
    %v598 = vunpack.c.h.b16 %v139
    %v599 = vunpack.c.l.b16 %v140
    %v600 = vunpack.c.h.b16 %v140
    %v601 = vunpack.c.l.b16 %v141
    %v602 = vunpack.c.h.b16 %v141
    %v603 = vunpack.c.l.b16 %v142
    %v604 = vunpack.c.h.b16 %v142
    %v605 = vunpack.c.l.b16 %v143
    %v606 = vunpack.c.h.b16 %v143
    %v607 = vunpack.c.l.b16 %v144
    %v608 = vunpack.c.h.b16 %v144
    %v609 = vunpack.c.l.b16 %v145
    %v610 = vunpack.c.h.b16 %v145
    %v611 = vunpack.c.l.b16 %v146
    %v612 = vunpack.c.h.b16 %v146
    %v613 = vunpack.c.l.b16 %v147
    %v614 = vunpack.c.h.b16 %v147
    %v615 = vunpack.c.l.b16 %v148
    %v616 = vunpack.c.h.b16 %v148
    %v617 = vunpack.c.l.b16 %v149
    %v618 = vunpack.c.h.b16 %v149
    %v619 = vunpack.c.l.b16 %v150
    %v620 = vunpack.c.h.b16 %v150
    %v621 = vunpack.c.l.b16 %v151
    %v622 = vunpack.c.h.b16 %v151
    %v623 = vunpack.c.l.b16 %v152
    %v624 = vunpack.c.h.b16 %v152
    %v625 = vunpack.c.l.b16 %v153
    %v626 = vunpack.c.h.b16 %v153
    %v627 = vunpack.c.l.b16 %v154
    %v628 = vunpack.c.h.b16 %v154
    %v629 = vunpack.c.l.b16 %v155
    %v630 = vunpack.c.h.b16 %v155
    %v631 = vunpack.c.l.b16 %v156
    %v632 = vunpack.c.h.b16 %v156
    %v633 = vunpack.c.l.b16 %v157
    %v634 = vunpack.c.h.b16 %v157
    %v635 = vunpack.c.l.b16 %v158
    %v636 = vunpack.c.h.b16 %v158
    %v637 = vunpack.c.l.b16 %v159
    %v638 = vunpack.c.h.b16 %v159
    %v639 = vunpack.c.l.b16 %v160
    %v640 = vunpack.c.h.b16 %v160
    %v641 = vunpack.c.l.b16 %v161
    %v642 = vunpack.c.h.b16 %v161
    %v643 = vunpack.c.l.b16 %v162
    %v644 = vunpack.c.h.b16 %v162
    %v645 = vunpack.c.l.b16 %v163
    %v646 = vunpack.c.h.b16 %v163
    %v647 = vunpack.c.l.b16 %v164
    %v648 = vunpack.c.h.b16 %v164
    %v649 = vunpack.c.l.b16 %v165
    %v650 = vunpack.c.h.b16 %v165
    %v651 = vunpack.c.l.b16 %v166
    %v652 = vunpack.c.h.b16 %v166
    %v653 = vunpack.c.l.b16 %v167
    %v654 = vunpack.c.h.b16 %v167
    %v655 = vunpack.c.l.b16 %v168
    %v656 = vunpack.c.h.b16 %v168
    %v657 = vunpack.c.l.b16 %v169
    %v658 = vunpack.c.h.b16 %v169
    %v659 = vunpack.c.l.b16 %v170
    %v660 = vunpack.c.h.b16 %v170
    %v661 = vunpack.c.l.b16 %v171
    %v662 = vunpack.c.h.b16 %v171
    %v663 = vunpack.c.l.b16 %v172
    %v664 = vunpack.c.h.b16 %v172
    %v665 = vunpack.c.l.b16 %v173
    %v666 = vunpack.c.h.b16 %v173
    %v667 = vunpack.c.l.b16 %v174
    %v668 = vunpack.c.h.b16 %v174
    %v669 = vunpack.c.l.b16 %v175
    %v670 = vunpack.c.h.b16 %v175
    %v671 = vunpack.c.l.b16 %v176
    %v672 = vunpack.c.h.b16 %v176
    %v673 = vunpack.c.l.b16 %v177
    %v674 = vunpack.c.h.b16 %v177
    %v675 = vunpack.c.l.b16 %v178
    %v676 = vunpack.c.h.b16 %v178
    %v677 = vunpack.c.l.b16 %v179
    %v678 = vunpack.c.h.b16 %v179
    %v679 = vunpack.c.l.b16 %v180
    %v680 = vunpack.c.h.b16 %v180
    %v681 = vunpack.c.l.b16 %v181
    %v682 = vunpack.c.h.b16 %v181
    %v683 = vunpack.c.l.b16 %v182
    %v684 = vunpack.c.h.b16 %v182
    %v685 = vunpack.c.l.b16 %v183
    %v686 = vunpack.c.h.b16 %v183
    %v687 = vunpack.c.l.b16 %v184
    %v688 = vunpack.c.h.b16 %v184
    %v689 = vunpack.c.l.b16 %v185
    %v690 = vunpack.c.h.b16 %v185
    %v691 = vunpack.c.l.b16 %v186
    %v692 = vunpack.c.h.b16 %v186
    %v693 = vunpack.c.l.b16 %v187
    %v694 = vunpack.c.h.b16 %v187
    %v695 = vunpack.c.l.b16 %v188
    %v696 = vunpack.c.h.b16 %v188
    %v697 = vunpack.c.l.b16 %v189
    %v698 = vunpack.c.h.b16 %v189
    %v699 = vunpack.c.l.b16 %v190
    %v700 = vunpack.c.h.b16 %v190
    %v701 = vunpack.c.l.b16 %v191
    %v702 = vunpack.c.h.b16 %v191
    %v703 = vunpack.c.l.b16 %v192
    %v704 = vunpack.c.h.b16 %v192
    %v705 = vunpack.c.l.b16 %v193
    %v706 = vunpack.c.h.b16 %v193
    %v707 = vunpack.c.l.b16 %v194
    %v708 = vunpack.c.h.b16 %v194
    %v709 = vunpack.c.l.b16 %v195
    %v710 = vunpack.c.h.b16 %v195
    %v711 = vunpack.c.l.b16 %v196
    %v712 = vunpack.c.h.b16 %v196
    %v713 = vunpack.c.l.b16 %v197
    %v714 = vunpack.c.h.b16 %v197
    %v715 = vunpack.c.l.b16 %v198
    %v716 = vunpack.c.h.b16 %v198
    %v717 = vunpack.c.l.b16 %v199
    %v718 = vunpack.c.h.b16 %v199
    %v719 = vunpack.c.l.b16 %v200
    %v720 = vunpack.c.h.b16 %v200
    %v721 = vunpack.c.l.b16 %v201
    %v722 = vunpack.c.h.b16 %v201
    %v723 = vunpack.c.l.b16 %v202
    %v724 = vunpack.c.h.b16 %v202
    %v725 = vunpack.c.l.b16 %v203
    %v726 = vunpack.c.h.b16 %v203
    %v727 = vunpack.c.l.b16 %v204
    %v728 = vunpack.c.h.b16 %v204
    %v729 = vunpack.c.l.b16 %v205
    %v730 = vunpack.c.h.b16 %v205
    %v731 = vunpack.c.l.b16 %v206
    %v732 = vunpack.c.h.b16 %v206
    %v733 = vunpack.c.l.b16 %v207
    %v734 = vunpack.c.h.b16 %v207
    %v735 = vunpack.c.l.b16 %v208
    %v736 = vunpack.c.h.b16 %v208
    %v737 = vunpack.c.l.b16 %v209
    %v738 = vunpack.c.h.b16 %v209
    %v739 = vunpack.c.l.b16 %v210
    %v740 = vunpack.c.h.b16 %v210
    %v741 = vunpack.c.l.b16 %v211
    %v742 = vunpack.c.h.b16 %v211
    %v743 = vunpack.c.l.b16 %v212
    %v744 = vunpack.c.h.b16 %v212
    %v745 = vunpack.c.l.b16 %v213
    %v746 = vunpack.c.h.b16 %v213
    %v747 = vunpack.c.l.b16 %v214
    %v748 = vunpack.c.h.b16 %v214
    %v749 = vunpack.c.l.b16 %v215
    %v750 = vunpack.c.h.b16 %v215
    %v751 = vunpack.c.l.b16 %v216
    %v752 = vunpack.c.h.b16 %v216
    %v753 = vunpack.c.l.b16 %v217
    %v754 = vunpack.c.h.b16 %v217
    %v755 = vunpack.c.l.b16 %v218
    %v756 = vunpack.c.h.b16 %v218
    %v757 = vunpack.c.l.b16 %v219
    %v758 = vunpack.c.h.b16 %v219
    %v759 = vunpack.c.l.b16 %v220
    %v760 = vunpack.c.h.b16 %v220
    %v761 = vunpack.c.l.b16 %v221
    %v762 = vunpack.c.h.b16 %v221
    %v763 = vunpack.c.l.b16 %v222
    %v764 = vunpack.c.h.b16 %v222
    %v765 = vunpack.c.l.b16 %v223
    %v766 = vunpack.c.h.b16 %v223
    %v767 = vunpack.c.l.b16 %v224
    %v768 = vunpack.c.h.b16 %v224
    %v769 = vunpack.c.l.b16 %v225
    %v770 = vunpack.c.h.b16 %v225
    %v771 = vunpack.c.l.b16 %v226
    %v772 = vunpack.c.h.b16 %v226
    %v773 = vunpack.c.l.b16 %v227
    %v774 = vunpack.c.h.b16 %v227
    %v775 = vunpack.c.l.b16 %v228
    %v776 = vunpack.c.h.b16 %v228
    %v777 = vunpack.c.l.b16 %v229
    %v778 = vunpack.c.h.b16 %v229
    %v779 = vunpack.c.l.b16 %v230
    %v780 = vunpack.c.h.b16 %v230
    %v781 = vunpack.c.l.b16 %v231
    %v782 = vunpack.c.h.b16 %v231
    %v783 = vunpack.c.l.b16 %v232
    %v784 = vunpack.c.h.b16 %v232
    %v785 = vunpack.c.l.b16 %v233
    %v786 = vunpack.c.h.b16 %v233
    %v787 = vunpack.c.l.b16 %v234
    %v788 = vunpack.c.h.b16 %v234
    %v789 = vunpack.c.l.b16 %v235
    %v790 = vunpack.c.h.b16 %v235
    %v791 = vunpack.c.l.b16 %v236
    %v792 = vunpack.c.h.b16 %v236
    %v793 = vunpack.c.l.b16 %v237
    %v794 = vunpack.c.h.b16 %v237
    %v795 = vunpack.c.l.b16 %v238
    %v796 = vunpack.c.h.b16 %v238
    %v797 = vunpack.c.l.b16 %v239
    %v798 = vunpack.c.h.b16 %v239
    %v799 = vunpack.c.l.b16 %v240
    %v800 = vunpack.c.h.b16 %v240
    %v801 = vunpack.c.l.b16 %v241
    %v802 = vunpack.c.h.b16 %v241
    %v803 = vunpack.c.l.b16 %v242
    %v804 = vunpack.c.h.b16 %v242
    %v805 = vunpack.c.l.b16 %v243
    %v806 = vunpack.c.h.b16 %v243
    %v807 = vunpack.c.l.b16 %v244
    %v808 = vunpack.c.h.b16 %v244
    %v809 = vunpack.c.l.b16 %v245
    %v810 = vunpack.c.h.b16 %v245
    %v811 = vunpack.c.l.b16 %v246
    %v812 = vunpack.c.h.b16 %v246
    %v813 = vunpack.c.l.b16 %v247
    %v814 = vunpack.c.h.b16 %v247
    %v815 = vunpack.c.l.b16 %v248
    %v816 = vunpack.c.h.b16 %v248
    %v817 = vunpack.c.l.b16 %v249
    %v818 = vunpack.c.h.b16 %v249
    %v819 = vunpack.c.l.b16 %v250
    %v820 = vunpack.c.h.b16 %v250
    %v821 = vunpack.c.l.b16 %v251
    %v822 = vunpack.c.h.b16 %v251
    %v823 = vunpack.c.l.b16 %v252
    %v824 = vunpack.c.h.b16 %v252
    %v825 = vunpack.c.l.b16 %v253
    %v826 = vunpack.c.h.b16 %v253
    %v827 = vunpack.c.l.b16 %v254
    %v828 = vunpack.c.h.b16 %v254
    %v829 = vunpack.c.l.b16 %v255
    %v830 = vunpack.c.h.b16 %v255
    %v831 = vunpack.c.l.b16 %v256
    %v832 = vunpack.c.h.b16 %v256
    %v833 = vunpack.c.l.b16 %v257
    %v834 = vunpack.c.h.b16 %v257
    %v835 = vunpack.c.l.b16 %v258
    %v836 = vunpack.c.h.b16 %v258
    %v837 = vunpack.c.l.b16 %v259
    %v838 = vunpack.c.h.b16 %v259
    %v839 = vunpack.c.l.b16 %v260
    %v840 = vunpack.c.h.b16 %v260
    %v841 = vunpack.c.l.b16 %v261
    %v842 = vunpack.c.h.b16 %v261
    %v843 = vunpack.c.l.b16 %v262
    %v844 = vunpack.c.h.b16 %v262
    %v845 = vunpack.c.l.b16 %v263
    %v846 = vunpack.c.h.b16 %v263
    %v847 = vunpack.c.l.b16 %v264
    %v848 = vunpack.c.h.b16 %v264
    %v849 = vunpack.c.l.b16 %v265
    %v850 = vunpack.c.h.b16 %v265
    %v851 = vunpack.c.l.b16 %v266
    %v852 = vunpack.c.h.b16 %v266
    %v853 = vunpack.c.l.b16 %v267
    %v854 = vunpack.c.h.b16 %v267
    %v855 = vunpack.c.l.b16 %v268
    %v856 = vunpack.c.h.b16 %v268
    %v857 = vunpack.c.l.b16 %v269
    %v858 = vunpack.c.h.b16 %v269
    %v859 = vunpack.c.l.b16 %v270
    %v860 = vunpack.c.h.b16 %v270
    %v861 = vunpack.c.l.b16 %v271
    %v862 = vunpack.c.h.b16 %v271
    %v863 = vunpack.c.l.b16 %v272
    %v864 = vunpack.c.h.b16 %v272
    %v865 = vunpack.c.l.b16 %v273
    %v866 = vunpack.c.h.b16 %v273
    %v867 = vunpack.c.l.b16 %v274
    %v868 = vunpack.c.h.b16 %v274
    %v869 = vunpack.c.l.b16 %v275
    %v870 = vunpack.c.h.b16 %v275
    %v871 = vunpack.c.l.b16 %v276
    %v872 = vunpack.c.h.b16 %v276
    %v873 = vunpack.c.l.b16 %v277
    %v874 = vunpack.c.h.b16 %v277
    %v875 = vunpack.c.l.b16 %v278
    %v876 = vunpack.c.h.b16 %v278
    %v877 = vunpack.c.l.b16 %v279
    %v878 = vunpack.c.h.b16 %v279
    %v879 = vunpack.c.l.b16 %v280
    %v880 = vunpack.c.h.b16 %v280
    %v881 = vunpack.c.l.b16 %v281
    %v882 = vunpack.c.h.b16 %v281
    %v883 = vunpack.c.l.b16 %v282
    %v884 = vunpack.c.h.b16 %v282
    %v885 = vunpack.c.l.b16 %v283
    %v886 = vunpack.c.h.b16 %v283
    %v887 = vunpack.c.l.b16 %v284
    %v888 = vunpack.c.h.b16 %v284
    %v889 = vunpack.c.l.b16 %v285
    %v890 = vunpack.c.h.b16 %v285
    %v891 = vunpack.c.l.b16 %v286
    %v892 = vunpack.c.h.b16 %v286
    %v893 = vunpack.c.l.b16 %v287
    %v894 = vunpack.c.h.b16 %v287
    %v895 = vunpack.c.l.b16 %v288
    %v896 = vunpack.c.h.b16 %v288
    %v897 = vunpack.c.l.b16 %v289
    %v898 = vunpack.c.h.b16 %v289
    %v899 = vunpack.c.l.b16 %v290
    %v900 = vunpack.c.h.b16 %v290
    %v901 = vpack.c.b16 %v513, %v509
    %v902 = vpack.c.b16 %v514, %v510
    %v903 = vpack.c.b16 %v515, %v511
    %v904 = vpack.c.b16 %v516, %v512
    %v905 = vpack.c.b16 %v521, %v517
    %v906 = vpack.c.b16 %v522, %v518
    %v907 = vpack.c.b16 %v523, %v519
    %v908 = vpack.c.b16 %v524, %v520
    %v909 = vpack.c.b16 %v529, %v525
    %v910 = vpack.c.b16 %v530, %v526
    %v911 = vpack.c.b16 %v531, %v527
    %v912 = vpack.c.b16 %v532, %v528
    %v913 = vpack.c.b16 %v537, %v533
    %v914 = vpack.c.b16 %v538, %v534
    %v915 = vpack.c.b16 %v539, %v535
    %v916 = vpack.c.b16 %v540, %v536
    %v917 = vpack.c.b16 %v545, %v541
    %v918 = vpack.c.b16 %v546, %v542
    %v919 = vpack.c.b16 %v547, %v543
    %v920 = vpack.c.b16 %v548, %v544
    %v921 = vpack.c.b16 %v553, %v549
    %v922 = vpack.c.b16 %v554, %v550
    %v923 = vpack.c.b16 %v555, %v551
    %v924 = vpack.c.b16 %v556, %v552
    %v925 = vpack.c.b16 %v561, %v557
    %v926 = vpack.c.b16 %v562, %v558
    %v927 = vpack.c.b16 %v563, %v559
    %v928 = vpack.c.b16 %v564, %v560
    %v929 = vpack.c.b16 %v569, %v565
    %v930 = vpack.c.b16 %v570, %v566
    %v931 = vpack.c.b16 %v571, %v567
    %v932 = vpack.c.b16 %v572, %v568
    %v933 = vpack.c.b16 %v577, %v573
    %v934 = vpack.c.b16 %v578, %v574
    %v935 = vpack.c.b16 %v579, %v575
    %v936 = vpack.c.b16 %v580, %v576
    %v937 = vpack.c.b16 %v585, %v581
    %v938 = vpack.c.b16 %v586, %v582
    %v939 = vpack.c.b16 %v587, %v583
    %v940 = vpack.c.b16 %v588, %v584
    %v941 = vpack.c.b16 %v593, %v589
    %v942 = vpack.c.b16 %v594, %v590
    %v943 = vpack.c.b16 %v595, %v591
    %v944 = vpack.c.b16 %v596, %v592
    %v945 = vpack.c.b16 %v601, %v597
    %v946 = vpack.c.b16 %v602, %v598
    %v947 = vpack.c.b16 %v603, %v599
    %v948 = vpack.c.b16 %v604, %v600
    %v949 = vpack.c.b16 %v609, %v605
    %v950 = vpack.c.b16 %v610, %v606
    %v951 = vpack.c.b16 %v611, %v607
    %v952 = vpack.c.b16 %v612, %v608
    %v953 = vpack.c.b16 %v617, %v613
    %v954 = vpack.c.b16 %v618, %v614
    %v955 = vpack.c.b16 %v619, %v615
    %v956 = vpack.c.b16 %v620, %v616
    %v957 = vpack.c.b16 %v625, %v621
    %v958 = vpack.c.b16 %v626, %v622
    %v959 = vpack.c.b16 %v627, %v623
    %v960 = vpack.c.b16 %v628, %v624
    %v961 = vpack.c.b16 %v633, %v629
    %v962 = vpack.c.b16 %v634, %v630
    %v963 = vpack.c.b16 %v635, %v631
    %v964 = vpack.c.b16 %v636, %v632
    %v965 = vpack.c.b16 %v641, %v637
    %v966 = vpack.c.b16 %v642, %v638
    %v967 = vpack.c.b16 %v643, %v639
    %v968 = vpack.c.b16 %v644, %v640
    %v969 = vpack.c.b16 %v649, %v645
    %v970 = vpack.c.b16 %v650, %v646
    %v971 = vpack.c.b16 %v651, %v647
    %v972 = vpack.c.b16 %v652, %v648
    %v973 = vpack.c.b16 %v657, %v653
    %v974 = vpack.c.b16 %v658, %v654
    %v975 = vpack.c.b16 %v659, %v655
    %v976 = vpack.c.b16 %v660, %v656
    %v977 = vpack.c.b16 %v665, %v661
    %v978 = vpack.c.b16 %v666, %v662
    %v979 = vpack.c.b16 %v667, %v663
    %v980 = vpack.c.b16 %v668, %v664
    %v981 = vpack.c.b16 %v673, %v669
    %v982 = vpack.c.b16 %v674, %v670
    %v983 = vpack.c.b16 %v675, %v671
    %v984 = vpack.c.b16 %v676, %v672
    %v985 = vpack.c.b16 %v681, %v677
    %v986 = vpack.c.b16 %v682, %v678
    %v987 = vpack.c.b16 %v683, %v679
    %v988 = vpack.c.b16 %v684, %v680
    %v989 = vpack.c.b16 %v689, %v685
    %v990 = vpack.c.b16 %v690, %v686
    %v991 = vpack.c.b16 %v691, %v687
    %v992 = vpack.c.b16 %v692, %v688
    %v993 = vpack.c.b16 %v697, %v693
    %v994 = vpack.c.b16 %v698, %v694
    %v995 = vpack.c.b16 %v699, %v695
    %v996 = vpack.c.b16 %v700, %v696
    %v997 = vpack.c.b16 %v705, %v701
    %v998 = vpack.c.b16 %v706, %v702
    %v999 = vpack.c.b16 %v707, %v703
    %v1000 = vpack.c.b16 %v708, %v704
    %v1001 = vpack.c.b16 %v713, %v709
    %v1002 = vpack.c.b16 %v714, %v710
    %v1003 = vpack.c.b16 %v715, %v711
    %v1004 = vpack.c.b16 %v716, %v712
    %v1005 = vpack.c.b16 %v721, %v717
    %v1006 = vpack.c.b16 %v722, %v718
    %v1007 = vpack.c.b16 %v723, %v719
    %v1008 = vpack.c.b16 %v724, %v720
    %v1009 = vpack.c.b16 %v729, %v725
    %v1010 = vpack.c.b16 %v730, %v726
    %v1011 = vpack.c.b16 %v731, %v727
    %v1012 = vpack.c.b16 %v732, %v728
    %v1013 = vpack.c.b16 %v737, %v733
    %v1014 = vpack.c.b16 %v738, %v734
    %v1015 = vpack.c.b16 %v739, %v735
    %v1016 = vpack.c.b16 %v740, %v736
    %v1017 = vpack.c.b16 %v745, %v741
    %v1018 = vpack.c.b16 %v746, %v742
    %v1019 = vpack.c.b16 %v747, %v743
    %v1020 = vpack.c.b16 %v748, %v744
    %v1021 = vpack.c.b16 %v753, %v749
    %v1022 = vpack.c.b16 %v754, %v750
    %v1023 = vpack.c.b16 %v755, %v751
    %v1024 = vpack.c.b16 %v756, %v752
    %v1025 = vpack.c.b16 %v761, %v757
    %v1026 = vpack.c.b16 %v762, %v758
    %v1027 = vpack.c.b16 %v763, %v759
    %v1028 = vpack.c.b16 %v764, %v760
    %v1029 = vpack.c.b16 %v769, %v765
    %v1030 = vpack.c.b16 %v770, %v766
    %v1031 = vpack.c.b16 %v771, %v767
    %v1032 = vpack.c.b16 %v772, %v768
    %v1033 = vpack.c.b16 %v777, %v773
    %v1034 = vpack.c.b16 %v778, %v774
    %v1035 = vpack.c.b16 %v779, %v775
    %v1036 = vpack.c.b16 %v780, %v776
    %v1037 = vpack.c.b16 %v785, %v781
    %v1038 = vpack.c.b16 %v786, %v782
    %v1039 = vpack.c.b16 %v787, %v783
    %v1040 = vpack.c.b16 %v788, %v784
    %v1041 = vpack.c.b16 %v793, %v789
    %v1042 = vpack.c.b16 %v794, %v790
    %v1043 = vpack.c.b16 %v795, %v791
    %v1044 = vpack.c.b16 %v796, %v792
    %v1045 = vpack.c.b16 %v801, %v797
    %v1046 = vpack.c.b16 %v802, %v798
    %v1047 = vpack.c.b16 %v803, %v799
    %v1048 = vpack.c.b16 %v804, %v800
    %v1049 = vpack.c.b16 %v809, %v805
    %v1050 = vpack.c.b16 %v810, %v806
    %v1051 = vpack.c.b16 %v811, %v807
    %v1052 = vpack.c.b16 %v812, %v808
    %v1053 = vpack.c.b16 %v817, %v813
    %v1054 = vpack.c.b16 %v818, %v814
    %v1055 = vpack.c.b16 %v819, %v815
    %v1056 = vpack.c.b16 %v820, %v816
    %v1057 = vpack.c.b16 %v825, %v821
    %v1058 = vpack.c.b16 %v826, %v822
    %v1059 = vpack.c.b16 %v827, %v823
    %v1060 = vpack.c.b16 %v828, %v824
    %v1061 = vpack.c.b16 %v833, %v829
    %v1062 = vpack.c.b16 %v834, %v830
    %v1063 = vpack.c.b16 %v835, %v831
    %v1064 = vpack.c.b16 %v836, %v832
    %v1065 = vpack.c.b16 %v841, %v837
    %v1066 = vpack.c.b16 %v842, %v838
    %v1067 = vpack.c.b16 %v843, %v839
    %v1068 = vpack.c.b16 %v844, %v840
    %v1069 = vpack.c.b16 %v849, %v845
    %v1070 = vpack.c.b16 %v850, %v846
    %v1071 = vpack.c.b16 %v851, %v847
    %v1072 = vpack.c.b16 %v852, %v848
    %v1073 = vpack.c.b16 %v857, %v853
    %v1074 = vpack.c.b16 %v858, %v854
    %v1075 = vpack.c.b16 %v859, %v855
    %v1076 = vpack.c.b16 %v860, %v856
    %v1077 = vpack.c.b16 %v865, %v861
    %v1078 = vpack.c.b16 %v866, %v862
    %v1079 = vpack.c.b16 %v867, %v863
    %v1080 = vpack.c.b16 %v868, %v864
    %v1081 = vpack.c.b16 %v873, %v869
    %v1082 = vpack.c.b16 %v874, %v870
    %v1083 = vpack.c.b16 %v875, %v871
    %v1084 = vpack.c.b16 %v876, %v872
    %v1085 = vpack.c.b16 %v881, %v877
    %v1086 = vpack.c.b16 %v882, %v878
    %v1087 = vpack.c.b16 %v883, %v879
    %v1088 = vpack.c.b16 %v884, %v880
    %v1089 = vpack.c.b16 %v889, %v885
    %v1090 = vpack.c.b16 %v890, %v886
    %v1091 = vpack.c.b16 %v891, %v887
    %v1092 = vpack.c.b16 %v892, %v888
    %v1093 = vpack.c.b16 %v897, %v893
    %v1094 = vpack.c.b16 %v898, %v894
    %v1095 = vpack.c.b16 %v899, %v895
    %v1096 = vpack.c.b16 %v900, %v896
    %vm1293 = vcmask 130048
    %v1295 = vsel %vm1293, %v94, 0
    %1297 = vmatprep.subr.bf16.mxu0 %v902
    %1298 = vmatpush1.bf16.msra.mxu0 %v901
    %1299 = vmatprep.subr.bf16.mxu0 %v906
    %1300 = vmatpush1.bf16.msra.mxu0 %v905
    %1301 = vmatprep.subr.bf16.mxu0 %v910
    %1302 = vmatpush1.bf16.msra.mxu0 %v909
    %1303 = vmatprep.subr.bf16.mxu0 %v914
    %1304 = vmatpush1.bf16.msra.mxu0 %v913
    %1305 = vmatprep.subr.bf16.mxu0 %v918
    %1306 = vmatpush1.bf16.msra.mxu0 %v917
    %1307 = vmatprep.subr.bf16.mxu0 %v922
    %1308 = vmatpush1.bf16.msra.mxu0 %v921
    %1309 = vmatprep.subr.bf16.mxu0 %v926
    %1310 = vmatpush1.bf16.msra.mxu0 %v925
    %1311 = vmatprep.subr.bf16.mxu0 %v930
    %1312 = vmatpush1.bf16.msra.mxu0 %v929
    %1313 = vmatprep.subr.bf16.mxu0 %v934
    %1314 = vmatpush1.bf16.msra.mxu0 %v933
    %1315 = vmatprep.subr.bf16.mxu0 %v938
    %1316 = vmatpush1.bf16.msra.mxu0 %v937
    %1317 = vmatprep.subr.bf16.mxu0 %v942
    %1318 = vmatpush1.bf16.msra.mxu0 %v941
    %1319 = vmatprep.subr.bf16.mxu0 %v946
    %1320 = vmatpush1.bf16.msra.mxu0 %v945
    %1321 = vmatprep.subr.bf16.mxu0 %v950
    %1322 = vmatpush1.bf16.msra.mxu0 %v949
    %1323 = vmatprep.subr.bf16.mxu0 %v954
    %1324 = vmatpush1.bf16.msra.mxu0 %v953
    %1325 = vmatprep.subr.bf16.mxu0 %v958
    %1326 = vmatpush1.bf16.msra.mxu0 %v957
    %1327 = vmatprep.subr.bf16.mxu0 %v962
    %1328 = vmatpush1.bf16.msra.mxu0 %v961
    %1329 = vmatprep.mubr.bf16.mxu0 %v89
    %1330 = vmatmul.mubr.bf16.gmra.mrb[0].mxu0 %v88
    %v1331 = vpop.f32.mrb[0].mxu0
    %v1332 = vadd.f32 %v296, %v1331
    %v1333 = vpop.f32.mrb[0].mxu0
    %v1334 = vadd.f32 %v300, %v1333
    %v1335 = vpop.f32.mrb[0].mxu0
    %v1336 = vpop.f32.mrb[0].mxu0
    %1337 = vdwg.mxu0
    %1338 = vmatprep.subr.bf16.mxu0 %v966
    %1339 = vmatpush1.bf16.msra.mxu0 %v965
    %1340 = vmatprep.subr.bf16.mxu0 %v970
    %1341 = vmatpush1.bf16.msra.mxu0 %v969
    %1342 = vmatprep.subr.bf16.mxu0 %v974
    %1343 = vmatpush1.bf16.msra.mxu0 %v973
    %1344 = vmatprep.subr.bf16.mxu0 %v978
    %1345 = vmatpush1.bf16.msra.mxu0 %v977
    %1346 = vmatprep.subr.bf16.mxu0 %v982
    %1347 = vmatpush1.bf16.msra.mxu0 %v981
    %1348 = vmatprep.subr.bf16.mxu0 %v986
    %1349 = vmatpush1.bf16.msra.mxu0 %v985
    %1350 = vmatprep.subr.bf16.mxu0 %v990
    %1351 = vmatpush1.bf16.msra.mxu0 %v989
    %1352 = vmatprep.subr.bf16.mxu0 %v994
    %1353 = vmatpush1.bf16.msra.mxu0 %v993
    %1354 = vmatprep.subr.bf16.mxu0 %v998
    %1355 = vmatpush1.bf16.msra.mxu0 %v997
    %1356 = vmatprep.subr.bf16.mxu0 %v1002
    %1357 = vmatpush1.bf16.msra.mxu0 %v1001
    %1358 = vmatprep.subr.bf16.mxu0 %v1006
    %1359 = vmatpush1.bf16.msra.mxu0 %v1005
    %1360 = vmatprep.subr.bf16.mxu0 %v1010
    %1361 = vmatpush1.bf16.msra.mxu0 %v1009
    %1362 = vmatprep.subr.bf16.mxu0 %v1014
    %1363 = vmatpush1.bf16.msra.mxu0 %v1013
    %1364 = vmatprep.subr.bf16.mxu0 %v1018
    %1365 = vmatpush1.bf16.msra.mxu0 %v1017
    %1366 = vmatprep.subr.bf16.mxu0 %v1022
    %1367 = vmatpush1.bf16.msra.mxu0 %v1021
    %1368 = vmatprep.subr.bf16.mxu0 %v1026
    %1369 = vmatpush1.bf16.msra.mxu0 %v1025
    %1370 = vmatprep.mubr.bf16.mxu0 %v91
    %1371 = vmatmul.mubr.bf16.gmra.mrb[0].mxu0 %v90
    %v1372 = vpop.f32.mrb[0].mxu0
    %v1373 = vadd.f32 %v1332, %v1372
    %v1374 = vpop.f32.mrb[0].mxu0
    %v1375 = vadd.f32 %v1334, %v1374
    %v1376 = vpop.f32.mrb[0].mxu0
    %v1377 = vpop.f32.mrb[0].mxu0
    %1378 = vdwg.mxu0
    %1379 = vmatprep.subr.bf16.mxu0 %v1030
    %1380 = vmatpush1.bf16.msra.mxu0 %v1029
    %1381 = vmatprep.subr.bf16.mxu0 %v1034
    %1382 = vmatpush1.bf16.msra.mxu0 %v1033
    %1383 = vmatprep.subr.bf16.mxu0 %v1038
    %1384 = vmatpush1.bf16.msra.mxu0 %v1037
    %1385 = vmatprep.subr.bf16.mxu0 %v1042
    %1386 = vmatpush1.bf16.msra.mxu0 %v1041
    %1387 = vmatprep.subr.bf16.mxu0 %v1046
    %1388 = vmatpush1.bf16.msra.mxu0 %v1045
    %1389 = vmatprep.subr.bf16.mxu0 %v1050
    %1390 = vmatpush1.bf16.msra.mxu0 %v1049
    %1391 = vmatprep.subr.bf16.mxu0 %v1054
    %1392 = vmatpush1.bf16.msra.mxu0 %v1053
    %1393 = vmatprep.subr.bf16.mxu0 %v1058
    %1394 = vmatpush1.bf16.msra.mxu0 %v1057
    %1395 = vmatprep.subr.bf16.mxu0 %v1062
    %1396 = vmatpush1.bf16.msra.mxu0 %v1061
    %1397 = vmatprep.subr.bf16.mxu0 %v1066
    %1398 = vmatpush1.bf16.msra.mxu0 %v1065
    %1399 = vmatprep.subr.bf16.mxu0 %v1070
    %1400 = vmatpush1.bf16.msra.mxu0 %v1069
    %1401 = vmatprep.subr.bf16.mxu0 %v1074
    %1402 = vmatpush1.bf16.msra.mxu0 %v1073
    %1403 = vmatprep.subr.bf16.mxu0 %v1078
    %1404 = vmatpush1.bf16.msra.mxu0 %v1077
    %1405 = vmatprep.subr.bf16.mxu0 %v1082
    %1406 = vmatpush1.bf16.msra.mxu0 %v1081
    %1407 = vmatprep.subr.bf16.mxu0 %v1086
    %1408 = vmatpush1.bf16.msra.mxu0 %v1085
    %1409 = vmatprep.subr.bf16.mxu0 %v1090
    %1410 = vmatpush1.bf16.msra.mxu0 %v1089
    %1411 = vmatprep.mubr.bf16.mxu0 %v93
    %1412 = vmatmul.mubr.bf16.gmra.mrb[0].mxu0 %v92
    %v1413 = vpop.f32.mrb[0].mxu0
    %v1414 = vadd.f32 %v1373, %v1413
    %v1415 = vpop.f32.mrb[0].mxu0
    %v1416 = vadd.f32 %v1375, %v1415
    %v1417 = vpop.f32.mrb[0].mxu0
    %v1418 = vpop.f32.mrb[0].mxu0
    %1419 = vdwg.mxu0
    %1420 = vmatprep.subr.bf16.mxu0 %v1094
    %1421 = vmatpush1.bf16.msra.mxu0 %v1093
    %1422 = vmatprep.subr.bf16.mxu0 0
    %1423 = vmatpush1.bf16.msra.mxu0 0
    %1424 = vmatprep.subr.bf16.mxu0 0
    %1425 = vmatpush1.bf16.msra.mxu0 0
    %1426 = vmatprep.subr.bf16.mxu0 0
    %1427 = vmatpush1.bf16.msra.mxu0 0
    %1428 = vmatprep.subr.bf16.mxu0 0
    %1429 = vmatpush1.bf16.msra.mxu0 0
    %1430 = vmatprep.subr.bf16.mxu0 0
    %1431 = vmatpush1.bf16.msra.mxu0 0
    %1432 = vmatprep.subr.bf16.mxu0 0
    %1433 = vmatpush1.bf16.msra.mxu0 0
    %1434 = vmatprep.subr.bf16.mxu0 0
    %1435 = vmatpush1.bf16.msra.mxu0 0
    %1436 = vmatprep.subr.bf16.mxu0 0
    %1437 = vmatpush1.bf16.msra.mxu0 0
    %1438 = vmatprep.subr.bf16.mxu0 0
    %1439 = vmatpush1.bf16.msra.mxu0 0
    %1440 = vmatprep.subr.bf16.mxu0 0
    %1441 = vmatpush1.bf16.msra.mxu0 0
    %1442 = vmatprep.subr.bf16.mxu0 0
    %1443 = vmatpush1.bf16.msra.mxu0 0
    %1444 = vmatprep.subr.bf16.mxu0 0
    %1445 = vmatpush1.bf16.msra.mxu0 0
    %1446 = vmatprep.subr.bf16.mxu0 0
    %1447 = vmatpush1.bf16.msra.mxu0 0
    %1448 = vmatprep.subr.bf16.mxu0 0
    %1449 = vmatpush1.bf16.msra.mxu0 0
    %1450 = vmatprep.subr.bf16.mxu0 0
    %1451 = vmatpush1.bf16.msra.mxu0 0
    %1452 = vmatprep.mubr.bf16.mxu0 0
    %1453 = vmatmul.mubr.bf16.gmra.mrb[0].mxu0 %v1295
    %v1454 = vpop.f32.mrb[0].mxu0
    %v1455 = vadd.f32 %v1414, %v1454
    %v1456 = vpop.f32.mrb[0].mxu0
    %v1457 = vadd.f32 %v1416, %v1456
    %v1458 = vpop.f32.mrb[0].mxu0
    %v1459 = vpop.f32.mrb[0].mxu0
    %1460 = vdwg.mxu0
    %1461 = vmatprep.subr.bf16.mxu0 %v904
    %1462 = vmatpush1.bf16.msra.mxu0 %v903
    %1463 = vmatprep.subr.bf16.mxu0 %v908
    %1464 = vmatpush1.bf16.msra.mxu0 %v907
    %1465 = vmatprep.subr.bf16.mxu0 %v912
    %1466 = vmatpush1.bf16.msra.mxu0 %v911
    %1467 = vmatprep.subr.bf16.mxu0 %v916
    %1468 = vmatpush1.bf16.msra.mxu0 %v915
    %1469 = vmatprep.subr.bf16.mxu0 %v920
    %1470 = vmatpush1.bf16.msra.mxu0 %v919
    %1471 = vmatprep.subr.bf16.mxu0 %v924
    %1472 = vmatpush1.bf16.msra.mxu0 %v923
    %1473 = vmatprep.subr.bf16.mxu0 %v928
    %1474 = vmatpush1.bf16.msra.mxu0 %v927
    %1475 = vmatprep.subr.bf16.mxu0 %v932
    %1476 = vmatpush1.bf16.msra.mxu0 %v931
    %1477 = vmatprep.subr.bf16.mxu0 %v936
    %1478 = vmatpush1.bf16.msra.mxu0 %v935
    %1479 = vmatprep.subr.bf16.mxu0 %v940
    %1480 = vmatpush1.bf16.msra.mxu0 %v939
    %1481 = vmatprep.subr.bf16.mxu0 %v944
    %1482 = vmatpush1.bf16.msra.mxu0 %v943
    %1483 = vmatprep.subr.bf16.mxu0 %v948
    %1484 = vmatpush1.bf16.msra.mxu0 %v947
    %1485 = vmatprep.subr.bf16.mxu0 %v952
    %1486 = vmatpush1.bf16.msra.mxu0 %v951
    %1487 = vmatprep.subr.bf16.mxu0 %v956
    %1488 = vmatpush1.bf16.msra.mxu0 %v955
    %1489 = vmatprep.subr.bf16.mxu0 %v960
    %1490 = vmatpush1.bf16.msra.mxu0 %v959
    %1491 = vmatprep.subr.bf16.mxu0 %v964
    %1492 = vmatpush1.bf16.msra.mxu0 %v963
    %1493 = vmatprep.mubr.bf16.mxu0 %v89
    %1494 = vmatmul.mubr.bf16.gmra.mrb[0].mxu0 %v88
    %v1495 = vpop.f32.mrb[0].mxu0
    %v1496 = vadd.f32 %v304, %v1495
    %v1497 = vpop.f32.mrb[0].mxu0
    %v1498 = vadd.f32 %v308, %v1497
    %v1499 = vpop.f32.mrb[0].mxu0
    %v1500 = vpop.f32.mrb[0].mxu0
    %1501 = vdwg.mxu0
    %1502 = vmatprep.subr.bf16.mxu0 %v968
    %1503 = vmatpush1.bf16.msra.mxu0 %v967
    %1504 = vmatprep.subr.bf16.mxu0 %v972
    %1505 = vmatpush1.bf16.msra.mxu0 %v971
    %1506 = vmatprep.subr.bf16.mxu0 %v976
    %1507 = vmatpush1.bf16.msra.mxu0 %v975
    %1508 = vmatprep.subr.bf16.mxu0 %v980
    %1509 = vmatpush1.bf16.msra.mxu0 %v979
    %1510 = vmatprep.subr.bf16.mxu0 %v984
    %1511 = vmatpush1.bf16.msra.mxu0 %v983
    %1512 = vmatprep.subr.bf16.mxu0 %v988
    %1513 = vmatpush1.bf16.msra.mxu0 %v987
    %1514 = vmatprep.subr.bf16.mxu0 %v992
    %1515 = vmatpush1.bf16.msra.mxu0 %v991
    %1516 = vmatprep.subr.bf16.mxu0 %v996
    %1517 = vmatpush1.bf16.msra.mxu0 %v995
    %1518 = vmatprep.subr.bf16.mxu0 %v1000
    %1519 = vmatpush1.bf16.msra.mxu0 %v999
    %1520 = vmatprep.subr.bf16.mxu0 %v1004
    %1521 = vmatpush1.bf16.msra.mxu0 %v1003
    %1522 = vmatprep.subr.bf16.mxu0 %v1008
    %1523 = vmatpush1.bf16.msra.mxu0 %v1007
    %1524 = vmatprep.subr.bf16.mxu0 %v1012
    %1525 = vmatpush1.bf16.msra.mxu0 %v1011
    %1526 = vmatprep.subr.bf16.mxu0 %v1016
    %1527 = vmatpush1.bf16.msra.mxu0 %v1015
    %1528 = vmatprep.subr.bf16.mxu0 %v1020
    %1529 = vmatpush1.bf16.msra.mxu0 %v1019
    %1530 = vmatprep.subr.bf16.mxu0 %v1024
    %1531 = vmatpush1.bf16.msra.mxu0 %v1023
    %1532 = vmatprep.subr.bf16.mxu0 %v1028
    %1533 = vmatpush1.bf16.msra.mxu0 %v1027
    %1534 = vmatprep.mubr.bf16.mxu0 %v91
    %1535 = vmatmul.mubr.bf16.gmra.mrb[0].mxu0 %v90
    %v1536 = vpop.f32.mrb[0].mxu0
    %v1537 = vadd.f32 %v1496, %v1536
    %v1538 = vpop.f32.mrb[0].mxu0
    %v1539 = vadd.f32 %v1498, %v1538
    %v1540 = vpop.f32.mrb[0].mxu0
    %v1541 = vpop.f32.mrb[0].mxu0
    %1542 = vdwg.mxu0
    %1543 = vmatprep.subr.bf16.mxu0 %v1032
    %1544 = vmatpush1.bf16.msra.mxu0 %v1031
    %1545 = vmatprep.subr.bf16.mxu0 %v1036
    %1546 = vmatpush1.bf16.msra.mxu0 %v1035
    %1547 = vmatprep.subr.bf16.mxu0 %v1040
    %1548 = vmatpush1.bf16.msra.mxu0 %v1039
    %1549 = vmatprep.subr.bf16.mxu0 %v1044
    %1550 = vmatpush1.bf16.msra.mxu0 %v1043
    %1551 = vmatprep.subr.bf16.mxu0 %v1048
    %1552 = vmatpush1.bf16.msra.mxu0 %v1047
    %1553 = vmatprep.subr.bf16.mxu0 %v1052
    %1554 = vmatpush1.bf16.msra.mxu0 %v1051
    %1555 = vmatprep.subr.bf16.mxu0 %v1056
    %1556 = vmatpush1.bf16.msra.mxu0 %v1055
    %1557 = vmatprep.subr.bf16.mxu0 %v1060
    %1558 = vmatpush1.bf16.msra.mxu0 %v1059
    %1559 = vmatprep.subr.bf16.mxu0 %v1064
    %1560 = vmatpush1.bf16.msra.mxu0 %v1063
    %1561 = vmatprep.subr.bf16.mxu0 %v1068
    %1562 = vmatpush1.bf16.msra.mxu0 %v1067
    %1563 = vmatprep.subr.bf16.mxu0 %v1072
    %1564 = vmatpush1.bf16.msra.mxu0 %v1071
    %1565 = vmatprep.subr.bf16.mxu0 %v1076
    %1566 = vmatpush1.bf16.msra.mxu0 %v1075
    %1567 = vmatprep.subr.bf16.mxu0 %v1080
    %1568 = vmatpush1.bf16.msra.mxu0 %v1079
    %1569 = vmatprep.subr.bf16.mxu0 %v1084
    %1570 = vmatpush1.bf16.msra.mxu0 %v1083
    %1571 = vmatprep.subr.bf16.mxu0 %v1088
    %1572 = vmatpush1.bf16.msra.mxu0 %v1087
    %1573 = vmatprep.subr.bf16.mxu0 %v1092
    %1574 = vmatpush1.bf16.msra.mxu0 %v1091
    %1575 = vmatprep.mubr.bf16.mxu0 %v93
    %1576 = vmatmul.mubr.bf16.gmra.mrb[0].mxu0 %v92
    %v1577 = vpop.f32.mrb[0].mxu0
    %v1578 = vadd.f32 %v1537, %v1577
    %v1579 = vpop.f32.mrb[0].mxu0
    %v1580 = vadd.f32 %v1539, %v1579
    %v1581 = vpop.f32.mrb[0].mxu0
    %v1582 = vpop.f32.mrb[0].mxu0
    %1583 = vdwg.mxu0
    %1584 = vmatprep.subr.bf16.mxu0 %v1096
    %1585 = vmatpush1.bf16.msra.mxu0 %v1095
    %1586 = vmatprep.subr.bf16.mxu0 0
    %1587 = vmatpush1.bf16.msra.mxu0 0
    %1588 = vmatprep.subr.bf16.mxu0 0
    %1589 = vmatpush1.bf16.msra.mxu0 0
    %1590 = vmatprep.subr.bf16.mxu0 0
    %1591 = vmatpush1.bf16.msra.mxu0 0
    %1592 = vmatprep.subr.bf16.mxu0 0
    %1593 = vmatpush1.bf16.msra.mxu0 0
    %1594 = vmatprep.subr.bf16.mxu0 0
    %1595 = vmatpush1.bf16.msra.mxu0 0
    %1596 = vmatprep.subr.bf16.mxu0 0
    %1597 = vmatpush1.bf16.msra.mxu0 0
    %1598 = vmatprep.subr.bf16.mxu0 0
    %1599 = vmatpush1.bf16.msra.mxu0 0
    %1600 = vmatprep.subr.bf16.mxu0 0
    %1601 = vmatpush1.bf16.msra.mxu0 0
    %1602 = vmatprep.subr.bf16.mxu0 0
    %1603 = vmatpush1.bf16.msra.mxu0 0
    %1604 = vmatprep.subr.bf16.mxu0 0
    %1605 = vmatpush1.bf16.msra.mxu0 0
    %1606 = vmatprep.subr.bf16.mxu0 0
    %1607 = vmatpush1.bf16.msra.mxu0 0
    %1608 = vmatprep.subr.bf16.mxu0 0
    %1609 = vmatpush1.bf16.msra.mxu0 0
    %1610 = vmatprep.subr.bf16.mxu0 0
    %1611 = vmatpush1.bf16.msra.mxu0 0
    %1612 = vmatprep.subr.bf16.mxu0 0
    %1613 = vmatpush1.bf16.msra.mxu0 0
    %1614 = vmatprep.subr.bf16.mxu0 0
    %1615 = vmatpush1.bf16.msra.mxu0 0
    %1616 = vmatprep.mubr.bf16.mxu0 0
    %1617 = vmatmul.mubr.bf16.gmra.mrb[0].mxu0 %v1295
    %v1618 = vpop.f32.mrb[0].mxu0
    %v1619 = vadd.f32 %v1578, %v1618
    %v1620 = vpop.f32.mrb[0].mxu0
    %v1621 = vadd.f32 %v1580, %v1620
    %v1622 = vpop.f32.mrb[0].mxu0
    %v1623 = vpop.f32.mrb[0].mxu0
    %1624 = vdwg.mxu0
    %v1625 = vmax.f32 %v1455, 0.0
    %v1626 = vmax.f32 %v1457, 0.0
    %v1627 = vmax.f32 %v1619, 0.0
    %v1628 = vmax.f32 %v1621, 0.0
    %v1629 = vpack.c.bf16 %v1625, %v1625
    %v1630 = vpack.c.bf16 %v1626, %v1626
    %v1631 = vpack.c.bf16 %v1627, %v1627
    %v1632 = vpack.c.bf16 %v1628, %v1628
    %v1633 = vld [vmem:[#allocation7] sm:$0xff]
    %v1634 = vld [vmem:[#allocation7 + $0x8] sm:$0xff]
    %v1635 = vld [vmem:[#allocation7 + $0x10] sm:$0xff]
    %v1636 = vld [vmem:[#allocation7 + $0x18] sm:$0xff]
    %v1637 = vld [vmem:[#allocation7 + $0x20] sm:$0xff]
    %v1638 = vld [vmem:[#allocation7 + $0x28] sm:$0xff]
    %v1639 = vld [vmem:[#allocation7 + $0x30] sm:$0xff]
    %v1640 = vld [vmem:[#allocation7 + $0x38] sm:$0xff]
    %v1641 = vld [vmem:[#allocation7 + $0x40] sm:$0xff]
    %v1642 = vld [vmem:[#allocation7 + $0x48] sm:$0xff]
    %v1643 = vld [vmem:[#allocation7 + $0x50] sm:$0xff]
    %v1644 = vld [vmem:[#allocation7 + $0x58] sm:$0xff]
    %v1645 = vld [vmem:[#allocation7 + $0x60] sm:$0xff]
    %v1646 = vld [vmem:[#allocation7 + $0x68] sm:$0xff]
    %v1647 = vld [vmem:[#allocation7 + $0x70] sm:$0xff]
    %v1648 = vld [vmem:[#allocation7 + $0x78] sm:$0xff]
    %v1649 = vld [vmem:[#allocation7 + $0x80] sm:$0xff]
    %v1650 = vld [vmem:[#allocation7 + $0x88] sm:$0xff]
    %v1651 = vld [vmem:[#allocation7 + $0x90] sm:$0xff]
    %v1652 = vld [vmem:[#allocation7 + $0x98] sm:$0xff]
    %v1653 = vld [vmem:[#allocation7 + $0xa0] sm:$0xff]
    %v1654 = vld [vmem:[#allocation7 + $0xa8] sm:$0xff]
    %v1655 = vld [vmem:[#allocation7 + $0xb0] sm:$0xff]
    %v1656 = vld [vmem:[#allocation7 + $0xb8] sm:$0xff]
    %v1657 = vld [vmem:[#allocation7 + $0xc0] sm:$0xff]
    %v1658 = vld [vmem:[#allocation7 + $0xc8] sm:$0xff]
    %v1659 = vld [vmem:[#allocation7 + $0xd0] sm:$0xff]
    %v1660 = vld [vmem:[#allocation7 + $0xd8] sm:$0xff]
    %v1661 = vld [vmem:[#allocation7 + $0xe0] sm:$0xff]
    %v1662 = vld [vmem:[#allocation7 + $0xe8] sm:$0xff]
    %v1663 = vld [vmem:[#allocation7 + $0xf0] sm:$0xff]
    %v1664 = vld [vmem:[#allocation7 + $0xf8] sm:$0xff]
    %v1665 = vld [vmem:[#allocation7 + $0x100] sm:$0xff]
    %v1666 = vld [vmem:[#allocation7 + $0x108] sm:$0xff]
    %v1667 = vld [vmem:[#allocation7 + $0x110] sm:$0xff]
    %v1668 = vld [vmem:[#allocation7 + $0x118] sm:$0xff]
    %v1669 = vld [vmem:[#allocation7 + $0x120] sm:$0xff]
    %v1670 = vld [vmem:[#allocation7 + $0x128] sm:$0xff]
    %v1671 = vld [vmem:[#allocation7 + $0x130] sm:$0xff]
    %v1672 = vld [vmem:[#allocation7 + $0x138] sm:$0xff]
    %v1673 = vld [vmem:[#allocation7 + $0x140] sm:$0xff]
    %v1674 = vld [vmem:[#allocation7 + $0x148] sm:$0xff]
    %v1675 = vld [vmem:[#allocation7 + $0x150] sm:$0xff]
    %v1676 = vld [vmem:[#allocation7 + $0x158] sm:$0xff]
    %v1677 = vld [vmem:[#allocation7 + $0x160] sm:$0xff]
    %v1678 = vld [vmem:[#allocation7 + $0x168] sm:$0xff]
    %v1679 = vld [vmem:[#allocation7 + $0x170] sm:$0xff]
    %v1680 = vld [vmem:[#allocation7 + $0x178] sm:$0xff]
    %v1681 = vld [vmem:[#allocation7 + $0x180] sm:$0xff]
    %v1682 = vld [vmem:[#allocation7 + $0x188] sm:$0xff]
    %v1683 = vld [vmem:[#allocation7 + $0x190] sm:$0xff]
    %v1684 = vld [vmem:[#allocation7 + $0x198] sm:$0xff]
    %v1685 = vld [vmem:[#allocation7 + $0x1a0] sm:$0xff]
    %v1686 = vld [vmem:[#allocation7 + $0x1a8] sm:$0xff]
    %v1687 = vld [vmem:[#allocation7 + $0x1b0] sm:$0xff]
    %v1688 = vld [vmem:[#allocation7 + $0x1b8] sm:$0xff]
    %v1689 = vld [vmem:[#allocation7 + $0x1c0] sm:$0xff]
    %v1690 = vld [vmem:[#allocation7 + $0x1c8] sm:$0xff]
    %v1691 = vld [vmem:[#allocation7 + $0x1d0] sm:$0xff]
    %v1692 = vld [vmem:[#allocation7 + $0x1d8] sm:$0xff]
    %v1693 = vld [vmem:[#allocation7 + $0x1e0] sm:$0xff]
    %v1694 = vld [vmem:[#allocation7 + $0x1e8] sm:$0xff]
    %v1695 = vld [vmem:[#allocation7 + $0x1f0] sm:$0xff]
    %v1696 = vld [vmem:[#allocation7 + $0x1f8] sm:$0xff]
    %v1697 = vld [vmem:[%s4] sm:$0x3]
    %v1699 = vlaneseq
    %v1700 = vshrl.u32 %v1699, 7
    %v1701 = vsub.s32 0, %v1700
    %v1702 = vrot.slane %v1697, %v1701
    %v1703 = vlaneseq
    %v1704 = vshrl.u32 %v1703, 7
    %v1705 = vsub.s32 1, %v1704
    %v1706 = vrot.slane %v1697, %v1705
    %v1773 = vunpack.c.l.b16 %v1633
    %v1774 = vunpack.c.h.b16 %v1633
    %v1775 = vunpack.c.l.b16 %v1634
    %v1776 = vunpack.c.h.b16 %v1634
    %v1777 = vunpack.c.l.b16 %v1635
    %v1778 = vunpack.c.h.b16 %v1635
    %v1779 = vunpack.c.l.b16 %v1636
    %v1780 = vunpack.c.h.b16 %v1636
    %v1781 = vunpack.c.l.b16 %v1637
    %v1782 = vunpack.c.h.b16 %v1637
    %v1783 = vunpack.c.l.b16 %v1638
    %v1784 = vunpack.c.h.b16 %v1638
    %v1785 = vunpack.c.l.b16 %v1639
    %v1786 = vunpack.c.h.b16 %v1639
    %v1787 = vunpack.c.l.b16 %v1640
    %v1788 = vunpack.c.h.b16 %v1640
    %v1789 = vunpack.c.l.b16 %v1641
    %v1790 = vunpack.c.h.b16 %v1641
    %v1791 = vunpack.c.l.b16 %v1642
    %v1792 = vunpack.c.h.b16 %v1642
    %v1793 = vunpack.c.l.b16 %v1643
    %v1794 = vunpack.c.h.b16 %v1643
    %v1795 = vunpack.c.l.b16 %v1644
    %v1796 = vunpack.c.h.b16 %v1644
    %v1797 = vunpack.c.l.b16 %v1645
    %v1798 = vunpack.c.h.b16 %v1645
    %v1799 = vunpack.c.l.b16 %v1646
    %v1800 = vunpack.c.h.b16 %v1646
    %v1801 = vunpack.c.l.b16 %v1647
    %v1802 = vunpack.c.h.b16 %v1647
    %v1803 = vunpack.c.l.b16 %v1648
    %v1804 = vunpack.c.h.b16 %v1648
    %v1805 = vunpack.c.l.b16 %v1649
    %v1806 = vunpack.c.h.b16 %v1649
    %v1807 = vunpack.c.l.b16 %v1650
    %v1808 = vunpack.c.h.b16 %v1650
    %v1809 = vunpack.c.l.b16 %v1651
    %v1810 = vunpack.c.h.b16 %v1651
    %v1811 = vunpack.c.l.b16 %v1652
    %v1812 = vunpack.c.h.b16 %v1652
    %v1813 = vunpack.c.l.b16 %v1653
    %v1814 = vunpack.c.h.b16 %v1653
    %v1815 = vunpack.c.l.b16 %v1654
    %v1816 = vunpack.c.h.b16 %v1654
    %v1817 = vunpack.c.l.b16 %v1655
    %v1818 = vunpack.c.h.b16 %v1655
    %v1819 = vunpack.c.l.b16 %v1656
    %v1820 = vunpack.c.h.b16 %v1656
    %v1821 = vunpack.c.l.b16 %v1657
    %v1822 = vunpack.c.h.b16 %v1657
    %v1823 = vunpack.c.l.b16 %v1658
    %v1824 = vunpack.c.h.b16 %v1658
    %v1825 = vunpack.c.l.b16 %v1659
    %v1826 = vunpack.c.h.b16 %v1659
    %v1827 = vunpack.c.l.b16 %v1660
    %v1828 = vunpack.c.h.b16 %v1660
    %v1829 = vunpack.c.l.b16 %v1661
    %v1830 = vunpack.c.h.b16 %v1661
    %v1831 = vunpack.c.l.b16 %v1662
    %v1832 = vunpack.c.h.b16 %v1662
    %v1833 = vunpack.c.l.b16 %v1663
    %v1834 = vunpack.c.h.b16 %v1663
    %v1835 = vunpack.c.l.b16 %v1664
    %v1836 = vunpack.c.h.b16 %v1664
    %v1837 = vunpack.c.l.b16 %v1665
    %v1838 = vunpack.c.h.b16 %v1665
    %v1839 = vunpack.c.l.b16 %v1666
    %v1840 = vunpack.c.h.b16 %v1666
    %v1841 = vunpack.c.l.b16 %v1667
    %v1842 = vunpack.c.h.b16 %v1667
    %v1843 = vunpack.c.l.b16 %v1668
    %v1844 = vunpack.c.h.b16 %v1668
    %v1845 = vunpack.c.l.b16 %v1669
    %v1846 = vunpack.c.h.b16 %v1669
    %v1847 = vunpack.c.l.b16 %v1670
    %v1848 = vunpack.c.h.b16 %v1670
    %v1849 = vunpack.c.l.b16 %v1671
    %v1850 = vunpack.c.h.b16 %v1671
    %v1851 = vunpack.c.l.b16 %v1672
    %v1852 = vunpack.c.h.b16 %v1672
    %v1853 = vunpack.c.l.b16 %v1673
    %v1854 = vunpack.c.h.b16 %v1673
    %v1855 = vunpack.c.l.b16 %v1674
    %v1856 = vunpack.c.h.b16 %v1674
    %v1857 = vunpack.c.l.b16 %v1675
    %v1858 = vunpack.c.h.b16 %v1675
    %v1859 = vunpack.c.l.b16 %v1676
    %v1860 = vunpack.c.h.b16 %v1676
    %v1861 = vunpack.c.l.b16 %v1677
    %v1862 = vunpack.c.h.b16 %v1677
    %v1863 = vunpack.c.l.b16 %v1678
    %v1864 = vunpack.c.h.b16 %v1678
    %v1865 = vunpack.c.l.b16 %v1679
    %v1866 = vunpack.c.h.b16 %v1679
    %v1867 = vunpack.c.l.b16 %v1680
    %v1868 = vunpack.c.h.b16 %v1680
    %v1869 = vunpack.c.l.b16 %v1681
    %v1870 = vunpack.c.h.b16 %v1681
    %v1871 = vunpack.c.l.b16 %v1682
    %v1872 = vunpack.c.h.b16 %v1682
    %v1873 = vunpack.c.l.b16 %v1683
    %v1874 = vunpack.c.h.b16 %v1683
    %v1875 = vunpack.c.l.b16 %v1684
    %v1876 = vunpack.c.h.b16 %v1684
    %v1877 = vunpack.c.l.b16 %v1685
    %v1878 = vunpack.c.h.b16 %v1685
    %v1879 = vunpack.c.l.b16 %v1686
    %v1880 = vunpack.c.h.b16 %v1686
    %v1881 = vunpack.c.l.b16 %v1687
    %v1882 = vunpack.c.h.b16 %v1687
    %v1883 = vunpack.c.l.b16 %v1688
    %v1884 = vunpack.c.h.b16 %v1688
    %v1885 = vunpack.c.l.b16 %v1689
    %v1886 = vunpack.c.h.b16 %v1689
    %v1887 = vunpack.c.l.b16 %v1690
    %v1888 = vunpack.c.h.b16 %v1690
    %v1889 = vunpack.c.l.b16 %v1691
    %v1890 = vunpack.c.h.b16 %v1691
    %v1891 = vunpack.c.l.b16 %v1692
    %v1892 = vunpack.c.h.b16 %v1692
    %v1893 = vunpack.c.l.b16 %v1693
    %v1894 = vunpack.c.h.b16 %v1693
    %v1895 = vunpack.c.l.b16 %v1694
    %v1896 = vunpack.c.h.b16 %v1694
    %v1897 = vunpack.c.l.b16 %v1695
    %v1898 = vunpack.c.h.b16 %v1695
    %v1899 = vunpack.c.l.b16 %v1696
    %v1900 = vunpack.c.h.b16 %v1696
    %v1901 = vpack.c.b16 %v1775, %v1773
    %v1902 = vpack.c.b16 %v1776, %v1774
    %v1903 = vpack.c.b16 %v1779, %v1777
    %v1904 = vpack.c.b16 %v1780, %v1778
    %v1905 = vpack.c.b16 %v1783, %v1781
    %v1906 = vpack.c.b16 %v1784, %v1782
    %v1907 = vpack.c.b16 %v1787, %v1785
    %v1908 = vpack.c.b16 %v1788, %v1786
    %v1909 = vpack.c.b16 %v1791, %v1789
    %v1910 = vpack.c.b16 %v1792, %v1790
    %v1911 = vpack.c.b16 %v1795, %v1793
    %v1912 = vpack.c.b16 %v1796, %v1794
    %v1913 = vpack.c.b16 %v1799, %v1797
    %v1914 = vpack.c.b16 %v1800, %v1798
    %v1915 = vpack.c.b16 %v1803, %v1801
    %v1916 = vpack.c.b16 %v1804, %v1802
    %v1917 = vpack.c.b16 %v1807, %v1805
    %v1918 = vpack.c.b16 %v1808, %v1806
    %v1919 = vpack.c.b16 %v1811, %v1809
    %v1920 = vpack.c.b16 %v1812, %v1810
    %v1921 = vpack.c.b16 %v1815, %v1813
    %v1922 = vpack.c.b16 %v1816, %v1814
    %v1923 = vpack.c.b16 %v1819, %v1817
    %v1924 = vpack.c.b16 %v1820, %v1818
    %v1925 = vpack.c.b16 %v1823, %v1821
    %v1926 = vpack.c.b16 %v1824, %v1822
    %v1927 = vpack.c.b16 %v1827, %v1825
    %v1928 = vpack.c.b16 %v1828, %v1826
    %v1929 = vpack.c.b16 %v1831, %v1829
    %v1930 = vpack.c.b16 %v1832, %v1830
    %v1931 = vpack.c.b16 %v1835, %v1833
    %v1932 = vpack.c.b16 %v1836, %v1834
    %v1933 = vpack.c.b16 %v1839, %v1837
    %v1934 = vpack.c.b16 %v1840, %v1838
    %v1935 = vpack.c.b16 %v1843, %v1841
    %v1936 = vpack.c.b16 %v1844, %v1842
    %v1937 = vpack.c.b16 %v1847, %v1845
    %v1938 = vpack.c.b16 %v1848, %v1846
    %v1939 = vpack.c.b16 %v1851, %v1849
    %v1940 = vpack.c.b16 %v1852, %v1850
    %v1941 = vpack.c.b16 %v1855, %v1853
    %v1942 = vpack.c.b16 %v1856, %v1854
    %v1943 = vpack.c.b16 %v1859, %v1857
    %v1944 = vpack.c.b16 %v1860, %v1858
    %v1945 = vpack.c.b16 %v1863, %v1861
    %v1946 = vpack.c.b16 %v1864, %v1862
    %v1947 = vpack.c.b16 %v1867, %v1865
    %v1948 = vpack.c.b16 %v1868, %v1866
    %v1949 = vpack.c.b16 %v1871, %v1869
    %v1950 = vpack.c.b16 %v1872, %v1870
    %v1951 = vpack.c.b16 %v1875, %v1873
    %v1952 = vpack.c.b16 %v1876, %v1874
    %v1953 = vpack.c.b16 %v1879, %v1877
    %v1954 = vpack.c.b16 %v1880, %v1878
    %v1955 = vpack.c.b16 %v1883, %v1881
    %v1956 = vpack.c.b16 %v1884, %v1882
    %v1957 = vpack.c.b16 %v1887, %v1885
    %v1958 = vpack.c.b16 %v1888, %v1886
    %v1959 = vpack.c.b16 %v1891, %v1889
    %v1960 = vpack.c.b16 %v1892, %v1890
    %v1961 = vpack.c.b16 %v1895, %v1893
    %v1962 = vpack.c.b16 %v1896, %v1894
    %v1963 = vpack.c.b16 %v1899, %v1897
    %v1964 = vpack.c.b16 %v1900, %v1898
    %2029 = vmatprep.subr.bf16.mxu0 %v1902
    %2030 = vmatpush1.bf16.msra.mxu0 %v1901
    %2031 = vmatprep.subr.bf16.mxu0 %v1904
    %2032 = vmatpush1.bf16.msra.mxu0 %v1903
    %2033 = vmatprep.subr.bf16.mxu0 %v1906
    %2034 = vmatpush1.bf16.msra.mxu0 %v1905
    %2035 = vmatprep.subr.bf16.mxu0 %v1908
    %2036 = vmatpush1.bf16.msra.mxu0 %v1907
    %2037 = vmatprep.subr.bf16.mxu0 %v1910
    %2038 = vmatpush1.bf16.msra.mxu0 %v1909
    %2039 = vmatprep.subr.bf16.mxu0 %v1912
    %2040 = vmatpush1.bf16.msra.mxu0 %v1911
    %2041 = vmatprep.subr.bf16.mxu0 %v1914
    %2042 = vmatpush1.bf16.msra.mxu0 %v1913
    %2043 = vmatprep.subr.bf16.mxu0 %v1916
    %2044 = vmatpush1.bf16.msra.mxu0 %v1915
    %2045 = vmatprep.subr.bf16.mxu0 %v1918
    %2046 = vmatpush1.bf16.msra.mxu0 %v1917
    %2047 = vmatprep.subr.bf16.mxu0 %v1920
    %2048 = vmatpush1.bf16.msra.mxu0 %v1919
    %2049 = vmatprep.subr.bf16.mxu0 %v1922
    %2050 = vmatpush1.bf16.msra.mxu0 %v1921
    %2051 = vmatprep.subr.bf16.mxu0 %v1924
    %2052 = vmatpush1.bf16.msra.mxu0 %v1923
    %2053 = vmatprep.subr.bf16.mxu0 %v1926
    %2054 = vmatpush1.bf16.msra.mxu0 %v1925
    %2055 = vmatprep.subr.bf16.mxu0 %v1928
    %2056 = vmatpush1.bf16.msra.mxu0 %v1927
    %2057 = vmatprep.subr.bf16.mxu0 %v1930
    %2058 = vmatpush1.bf16.msra.mxu0 %v1929
    %2059 = vmatprep.subr.bf16.mxu0 %v1932
    %2060 = vmatpush1.bf16.msra.mxu0 %v1931
    %2061 = vmatprep.mubr.bf16.mxu0 %v1630
    %2062 = vmatmul.mubr.bf16.gmra.mrb[0].mxu0 %v1629
    %v2063 = vpop.f32.mrb[0].mxu0
    %v2064 = vadd.f32 %v1702, %v2063
    %v2065 = vpop.f32.mrb[0].mxu0
    %v2066 = vadd.f32 %v1706, %v2065
    %v2067 = vpop.f32.mrb[0].mxu0
    %v2068 = vpop.f32.mrb[0].mxu0
    %2069 = vdwg.mxu0
    %2070 = vmatprep.subr.bf16.mxu0 %v1934
    %2071 = vmatpush1.bf16.msra.mxu0 %v1933
    %2072 = vmatprep.subr.bf16.mxu0 %v1936
    %2073 = vmatpush1.bf16.msra.mxu0 %v1935
    %2074 = vmatprep.subr.bf16.mxu0 %v1938
    %2075 = vmatpush1.bf16.msra.mxu0 %v1937
    %2076 = vmatprep.subr.bf16.mxu0 %v1940
    %2077 = vmatpush1.bf16.msra.mxu0 %v1939
    %2078 = vmatprep.subr.bf16.mxu0 %v1942
    %2079 = vmatpush1.bf16.msra.mxu0 %v1941
    %2080 = vmatprep.subr.bf16.mxu0 %v1944
    %2081 = vmatpush1.bf16.msra.mxu0 %v1943
    %2082 = vmatprep.subr.bf16.mxu0 %v1946
    %2083 = vmatpush1.bf16.msra.mxu0 %v1945
    %2084 = vmatprep.subr.bf16.mxu0 %v1948
    %2085 = vmatpush1.bf16.msra.mxu0 %v1947
    %2086 = vmatprep.subr.bf16.mxu0 %v1950
    %2087 = vmatpush1.bf16.msra.mxu0 %v1949
    %2088 = vmatprep.subr.bf16.mxu0 %v1952
    %2089 = vmatpush1.bf16.msra.mxu0 %v1951
    %2090 = vmatprep.subr.bf16.mxu0 %v1954
    %2091 = vmatpush1.bf16.msra.mxu0 %v1953
    %2092 = vmatprep.subr.bf16.mxu0 %v1956
    %2093 = vmatpush1.bf16.msra.mxu0 %v1955
    %2094 = vmatprep.subr.bf16.mxu0 %v1958
    %2095 = vmatpush1.bf16.msra.mxu0 %v1957
    %2096 = vmatprep.subr.bf16.mxu0 %v1960
    %2097 = vmatpush1.bf16.msra.mxu0 %v1959
    %2098 = vmatprep.subr.bf16.mxu0 %v1962
    %2099 = vmatpush1.bf16.msra.mxu0 %v1961
    %2100 = vmatprep.subr.bf16.mxu0 %v1964
    %2101 = vmatpush1.bf16.msra.mxu0 %v1963
    %2102 = vmatprep.mubr.bf16.mxu0 %v1632
    %2103 = vmatmul.mubr.bf16.gmra.mrb[0].mxu0 %v1631
    %v2104 = vpop.f32.mrb[0].mxu0
    %v2105 = vadd.f32 %v2064, %v2104
    %v2106 = vpop.f32.mrb[0].mxu0
    %v2107 = vadd.f32 %v2066, %v2106
    %v2108 = vpop.f32.mrb[0].mxu0
    %v2109 = vpop.f32.mrb[0].mxu0
    %2110 = vdwg.mxu0
    %v2111 = vmax.f32 %v2105, 0.0
    %v2112 = vmax.f32 %v2107, 0.0
    %v2113 = vpack.c.bf16 %v2111, %v2111
    %v2114 = vpack.c.bf16 %v2112, %v2112
    %v2115 = vld [vmem:[#allocation8] sm:$0xf]
    %v2116 = vld [vmem:[#allocation8 + $0x4] sm:$0xf]
    %v2117 = vld [vmem:[#allocation8 + $0x8] sm:$0xf]
    %v2118 = vld [vmem:[#allocation8 + $0xc] sm:$0xf]
    %v2119 = vld [vmem:[#allocation8 + $0x10] sm:$0xf]
    %v2120 = vld [vmem:[#allocation8 + $0x14] sm:$0xf]
    %v2121 = vld [vmem:[#allocation8 + $0x18] sm:$0xf]
    %v2122 = vld [vmem:[#allocation8 + $0x1c] sm:$0xf]
    %v2123 = vld [vmem:[#allocation8 + $0x20] sm:$0xf]
    %v2124 = vld [vmem:[#allocation8 + $0x24] sm:$0xf]
    %v2125 = vld [vmem:[#allocation8 + $0x28] sm:$0xf]
    %v2126 = vld [vmem:[#allocation8 + $0x2c] sm:$0xf]
    %v2127 = vld [vmem:[#allocation8 + $0x30] sm:$0xf]
    %v2128 = vld [vmem:[#allocation8 + $0x34] sm:$0xf]
    %v2129 = vld [vmem:[#allocation8 + $0x38] sm:$0xf]
    %v2130 = vld [vmem:[#allocation8 + $0x3c] sm:$0xf]
    %v2131 = vld [vmem:[#allocation8 + $0x40] sm:$0xf]
    %v2132 = vld [vmem:[#allocation8 + $0x44] sm:$0xf]
    %v2133 = vld [vmem:[#allocation8 + $0x48] sm:$0xf]
    %v2134 = vld [vmem:[#allocation8 + $0x4c] sm:$0xf]
    %v2135 = vld [vmem:[#allocation8 + $0x50] sm:$0xf]
    %v2136 = vld [vmem:[#allocation8 + $0x54] sm:$0xf]
    %v2137 = vld [vmem:[#allocation8 + $0x58] sm:$0xf]
    %v2138 = vld [vmem:[#allocation8 + $0x5c] sm:$0xf]
    %v2139 = vld [vmem:[#allocation8 + $0x60] sm:$0xf]
    %v2140 = vld [vmem:[#allocation8 + $0x64] sm:$0xf]
    %v2141 = vld [vmem:[#allocation8 + $0x68] sm:$0xf]
    %v2142 = vld [vmem:[#allocation8 + $0x6c] sm:$0xf]
    %v2143 = vld [vmem:[#allocation8 + $0x70] sm:$0xf]
    %v2144 = vld [vmem:[#allocation8 + $0x74] sm:$0xf]
    %v2145 = vld [vmem:[#allocation8 + $0x78] sm:$0xf]
    %v2146 = vld [vmem:[#allocation8 + $0x7c] sm:$0xf]
    %v2147 = vld [vmem:[%s6] sm:$0x1]
    %v2149 = vlaneseq
    %v2150 = vshrl.u32 %v2149, 7
    %v2151 = vsub.s32 0, %v2150
    %v2152 = vrot.slane %v2147, %v2151
    %v2186 = vunpack.c.l.b16 %v2115
    %v2187 = vunpack.c.l.b16 %v2116
    %v2188 = vunpack.c.l.b16 %v2117
    %v2189 = vunpack.c.l.b16 %v2118
    %v2190 = vunpack.c.l.b16 %v2119
    %v2191 = vunpack.c.l.b16 %v2120
    %v2192 = vunpack.c.l.b16 %v2121
    %v2193 = vunpack.c.l.b16 %v2122
    %v2194 = vunpack.c.l.b16 %v2123
    %v2195 = vunpack.c.l.b16 %v2124
    %v2196 = vunpack.c.l.b16 %v2125
    %v2197 = vunpack.c.l.b16 %v2126
    %v2198 = vunpack.c.l.b16 %v2127
    %v2199 = vunpack.c.l.b16 %v2128
    %v2200 = vunpack.c.l.b16 %v2129
    %v2201 = vunpack.c.l.b16 %v2130
    %v2202 = vunpack.c.l.b16 %v2131
    %v2203 = vunpack.c.l.b16 %v2132
    %v2204 = vunpack.c.l.b16 %v2133
    %v2205 = vunpack.c.l.b16 %v2134
    %v2206 = vunpack.c.l.b16 %v2135
    %v2207 = vunpack.c.l.b16 %v2136
    %v2208 = vunpack.c.l.b16 %v2137
    %v2209 = vunpack.c.l.b16 %v2138
    %v2210 = vunpack.c.l.b16 %v2139
    %v2211 = vunpack.c.l.b16 %v2140
    %v2212 = vunpack.c.l.b16 %v2141
    %v2213 = vunpack.c.l.b16 %v2142
    %v2214 = vunpack.c.l.b16 %v2143
    %v2215 = vunpack.c.l.b16 %v2144
    %v2216 = vunpack.c.l.b16 %v2145
    %v2217 = vunpack.c.l.b16 %v2146
    %v2218 = vpack.c.b16 %v2187, %v2186
    %v2219 = vpack.c.b16 %v2189, %v2188
    %v2220 = vpack.c.b16 %v2191, %v2190
    %v2221 = vpack.c.b16 %v2193, %v2192
    %v2222 = vpack.c.b16 %v2195, %v2194
    %v2223 = vpack.c.b16 %v2197, %v2196
    %v2224 = vpack.c.b16 %v2199, %v2198
    %v2225 = vpack.c.b16 %v2201, %v2200
    %v2226 = vpack.c.b16 %v2203, %v2202
    %v2227 = vpack.c.b16 %v2205, %v2204
    %v2228 = vpack.c.b16 %v2207, %v2206
    %v2229 = vpack.c.b16 %v2209, %v2208
    %v2230 = vpack.c.b16 %v2211, %v2210
    %v2231 = vpack.c.b16 %v2213, %v2212
    %v2232 = vpack.c.b16 %v2215, %v2214
    %v2233 = vpack.c.b16 %v2217, %v2216
    %2250 = vmatprep.subr.bf16.mxu0 0
    %2251 = vmatpush1.bf16.msra.mxu0 %v2218
    %2252 = vmatprep.subr.bf16.mxu0 0
    %2253 = vmatpush1.bf16.msra.mxu0 %v2219
    %2254 = vmatprep.subr.bf16.mxu0 0
    %2255 = vmatpush1.bf16.msra.mxu0 %v2220
    %2256 = vmatprep.subr.bf16.mxu0 0
    %2257 = vmatpush1.bf16.msra.mxu0 %v2221
    %2258 = vmatprep.subr.bf16.mxu0 0
    %2259 = vmatpush1.bf16.msra.mxu0 %v2222
    %2260 = vmatprep.subr.bf16.mxu0 0
    %2261 = vmatpush1.bf16.msra.mxu0 %v2223
    %2262 = vmatprep.subr.bf16.mxu0 0
    %2263 = vmatpush1.bf16.msra.mxu0 %v2224
    %2264 = vmatprep.subr.bf16.mxu0 0
    %2265 = vmatpush1.bf16.msra.mxu0 %v2225
    %2266 = vmatprep.subr.bf16.mxu0 0
    %2267 = vmatpush1.bf16.msra.mxu0 %v2226
    %2268 = vmatprep.subr.bf16.mxu0 0
    %2269 = vmatpush1.bf16.msra.mxu0 %v2227
    %2270 = vmatprep.subr.bf16.mxu0 0
    %2271 = vmatpush1.bf16.msra.mxu0 %v2228
    %2272 = vmatprep.subr.bf16.mxu0 0
    %2273 = vmatpush1.bf16.msra.mxu0 %v2229
    %2274 = vmatprep.subr.bf16.mxu0 0
    %2275 = vmatpush1.bf16.msra.mxu0 %v2230
    %2276 = vmatprep.subr.bf16.mxu0 0
    %2277 = vmatpush1.bf16.msra.mxu0 %v2231
    %2278 = vmatprep.subr.bf16.mxu0 0
    %2279 = vmatpush1.bf16.msra.mxu0 %v2232
    %2280 = vmatprep.subr.bf16.mxu0 0
    %2281 = vmatpush1.bf16.msra.mxu0 %v2233
    %2282 = vmatprep.mubr.bf16.mxu0 %v2114
    %2283 = vmatmul.mubr.bf16.gmra.mrb[0].mxu0 %v2113
    %v2284 = vpop.f32.mrb[0].mxu0
    %v2285 = vadd.f32 %v2152, %v2284
    %v2286 = vpop.f32.mrb[0].mxu0
    %v2287 = vpop.f32.mrb[0].mxu0
    %v2288 = vpop.f32.mrb[0].mxu0
    %2289 = vdwg.mxu0
    %v2290 = vlaneseq
    %v2291 = vand.u32 %v2290, 127
    %vm2292 = vcmp.lt.s32.totalorder %v2291, 10
    %v2293 = vsel %vm2292, %v2285, -1e+30
    %2294 = vmax.xlane.f32.xlu0 %v2293
    %v2295 = vpop.xlane.xlu0 %2294
    %v2296 = vsub.f32 %v2293, %v2295
    %v2297 = vmul.f32 %v2296, 1.442695
    %v2298 = vpow.pop %v2297
    %2299 = vadd.xlane.f32.xlu0 %v2298
    %v2300 = vpop.xlane.xlu0 %2299
    %v2301 = vlog2.pop %v2300
    %v2302 = vmul.f32 %v2301, 0.6931472
    %v2303 = vsub.f32 %v2296, %v2302
    %2304 = vst [vmem:[#allocation10] sm:$0xff] %v2303
    // Predicated region
    $region46: #{tpu_custom_call.1} parent=1 // pred_check
      _
    $region47: #{tpu_custom_call.1} parent=1 // pred_check_branch
      %2306 = sbr.rel (0) target = $region49
    $region48: #{tpu_custom_call.1} parent=1 // pred_region
      %s2308 = ssub.s32 128, 128
      %2309 = vsyncadd [#allocation4], %s2308
      %s2311 = sshll.u32 [#allocation10], 4
      %s2312 = int_to_ptr.vmem [resolvable:$true] %s2311
      %2314 = dma.vmem_to_hbm [thread:$0]  %s2312, 128, %s7, [#allocation4]
    $region49: #{tpu_custom_call.1} parent=1 // pred_fallthru
      _
    // Predicated region
    $region50: #{tpu_custom_call.1} parent=1 // pred_check
      _
    $region51: #{tpu_custom_call.1} parent=1 // pred_check_branch
      %2316 = sbr.rel (0) target = $region53
    $region52: #{tpu_custom_call.1} parent=1 // pred_region
      %2317 = dma.done [#allocation4], 128
    $region53: #{tpu_custom_call.1} parent=1 // pred_fallthru
      _
    %2318 = vsyncpa [#allocation3], 1
    %2319 = vsyncpa [#allocation6], 1
    %2320 = vsyncpa [#allocation9], 1
    %2321 = vsyncpa [#allocation4], 1

</llo_original>
